<compile_context>
chip_gen: v7x
topology: tpu7x:2x2x1
jax: 0.10.0
libtpu: 0.0.40
codegen_flags: <defaults>
</compile_context>

<pallas_src>
import jax
import jax.numpy as jnp
from jax import lax
from jax.experimental import pallas as pl
from jax.experimental.pallas import tpu as pltpu


def _round_up(x, m):
    return ((x + m - 1) // m) * m


def _pick_batch_tile(L, D, C, V2, budget_bytes=16 << 20):
    """Pick a batch tile TB (multiple of 8) from a conservative VMEM budget.

    Budget is kept well below the scoped-VMEM default so the choice is safe on
    v7x (64 MiB physical) as well as v5e/v6e (128 MiB).
    """
    resident = 4 * (V2 * D + D * D + D * C + 3 * D + 2 * C)   # table + weights
    per_row = 4 * 2 * (L + L * D + 3 * D + C)                 # double-buffered streams
    avail = budget_bytes - resident
    if avail <= 8 * per_row:
        return 8
    return int(min(1024, (avail // per_row) // 8 * 8))


def textcnn_lt_kernel(idx_ref, emb_ref, scale_ref, shift_ref,
                      w1_ref, b1_ref, w2_ref, b2_ref,
                      final_ref, fc1_ref, avgbn_ref, avg_ref, raw_ref):
    tb, L = idx_ref.shape
    V2, D = emb_ref.shape

    # --- fused embedding gather: one-hot(word_idx) @ embedding_table --------
    idx = idx_ref[...]                                            # (TB, L) int32
    vocab_iota = lax.broadcasted_iota(jnp.int32, (tb, L, V2), 2)
    onehot = (idx[:, :, None] == vocab_iota).astype(jnp.float32)  # (TB, L, V2)
    gathered = jnp.dot(onehot.reshape(tb * L, V2), emb_ref[...],
                       preferred_element_type=jnp.float32,
                       precision=lax.Precision.HIGHEST)           # (TB*L, D)
    raw = gathered.reshape(tb, L, D)                              # (TB, L, D)
    raw_ref[...] = raw                                            # module returns this

    # --- avg_pool1d over the sequence axis -> (TB, D) ------------------------
    x_avg = jnp.mean(raw, axis=1)
    avg_ref[...] = x_avg

    # --- BatchNorm1d (eval): y = x*scale + shift (stats folded in wrapper) ---
    x_avg_bn = x_avg * scale_ref[...] + shift_ref[...]
    avgbn_ref[...] = x_avg_bn

    # dropout (inference) -> identity
    x_fc1 = jnp.dot(x_avg_bn, w1_ref[...],
                    preferred_element_type=jnp.float32,
                    precision=lax.Precision.HIGHEST) + b1_ref[...]
    fc1_ref[...] = x_fc1

    # dropout (inference) -> identity
    x_final = jnp.dot(x_fc1, w2_ref[...],
                      preferred_element_type=jnp.float32,
                      precision=lax.Precision.HIGHEST) + b2_ref[...]
    final_ref[...] = x_final


def textcnn_lt_forward(word_idx, params, eps=1e-5, block_b=None):
    """Returns (x_final, x_fc1, x_avg_bn, x_avg, x_feat_permuted, raw_feature)."""
    emb_table = params["embedding"].astype(jnp.float32)           # (V+2, D)
    V2, D = emb_table.shape
    B, L = word_idx.shape
    C = params["w2"].shape[1]

    # Fold BatchNorm running stats into an affine transform (glue).
    scale = params["bn_gamma"] / jnp.sqrt(params["bn_var"] + eps)  # (D,)
    shift = params["bn_beta"] - params["bn_mean"] * scale          # (D,)
    scale2 = scale.reshape(1, D).astype(jnp.float32)
    shift2 = shift.reshape(1, D).astype(jnp.float32)
    # NOTE: w1/w2 are assumed in x @ W (in, out) layout; transpose torch Linear.
    w1 = params["w1"].astype(jnp.float32)                          # (D, D)
    b1 = params["b1"].reshape(1, D).astype(jnp.float32)
    w2 = params["w2"].astype(jnp.float32)                          # (D, C)
    b2 = params["b2"].reshape(1, C).astype(jnp.float32)

    # --- batch tiling --------------------------------------------------------
    if block_b is None:
        block_b = _pick_batch_tile(L, D, C, V2)
    tb = int(min(_round_up(block_b, 8), _round_up(B, 8)))
    b_pad = _round_up(B, tb)
    idx = word_idx.astype(jnp.int32)
    if b_pad != B:
        # Pad with the padding_idx row (vocab_size + 1); padded rows sliced off.
        idx = jnp.pad(idx, ((0, b_pad - B), (0, 0)), constant_values=V2 - 1)
    grid = (b_pad // tb,)

    out_shapes = (
        jax.ShapeDtypeStruct((b_pad, C), jnp.float32),     # x_final
        jax.ShapeDtypeStruct((b_pad, D), jnp.float32),     # x_fc1
        jax.ShapeDtypeStruct((b_pad, D), jnp.float32),     # x_avg_bn
        jax.ShapeDtypeStruct((b_pad, D), jnp.float32),     # x_avg
        jax.ShapeDtypeStruct((b_pad, L, D), jnp.float32),  # raw_feature
    )

    # Constant index_map -> block stays VMEM-resident across grid steps.
    resident = lambda shape: pl.BlockSpec(shape, lambda i: (0,) * len(shape))

    flops = 2 * b_pad * L * V2 * D + 2 * b_pad * D * D + 2 * b_pad * D * C
    bytes_accessed = 4 * (b_pad * L + V2 * D + D * D + D * C + 3 * D + 2 * C
                          + b_pad * (L * D + 3 * D + C))

    outs = pl.pallas_call(
        textcnn_lt_kernel,
        out_shape=out_shapes,
        grid=grid,
        in_specs=[
            pl.BlockSpec((tb, L), lambda i: (i, 0)),       # word_idx tile (streamed)
            resident((V2, D)),                             # embedding table (VMEM-resident)
            resident((1, D)),                              # bn scale
            resident((1, D)),                              # bn shift
            resident((D, D)),                              # fc1 weight
            resident((1, D)),                              # fc1 bias
            resident((D, C)),                              # fc2 weight
            resident((1, C)),                              # fc2 bias
        ],
        out_specs=[
            pl.BlockSpec((tb, C), lambda i: (i, 0)),
            pl.BlockSpec((tb, D), lambda i: (i, 0)),
            pl.BlockSpec((tb, D), lambda i: (i, 0)),
            pl.BlockSpec((tb, D), lambda i: (i, 0)),
            pl.BlockSpec((tb, L, D), lambda i: (i, 0, 0)),
        ],
        compiler_params=pltpu.CompilerParams(
            dimension_semantics=("parallel",)),
        cost_estimate=pl.CostEstimate(flops=flops, transcendentals=0,
                                      bytes_accessed=bytes_accessed),
    )(idx, emb_table, scale2, shift2, w1, b1, w2, b2)

    x_final, x_fc1, x_avg_bn, x_avg, raw_feature = (o[:B] for o in outs)
    # TextCNN_LT: x_feat = raw_feature.permute(0,2,1); the returned value is
    # x_feat.permute(0,2,1) == raw_feature (B, L, D).
    return x_final, x_fc1, x_avg_bn, x_avg, raw_feature, raw_feature


def _reference(word_idx, params, eps=1e-5):
    emb = jnp.take(params["embedding"], word_idx, axis=0)          # (B, L, D)
    x_avg = jnp.mean(emb, axis=1)                                  # (B, D)
    inv = 1.0 / jnp.sqrt(params["bn_var"] + eps)
    x_bn = (x_avg - params["bn_mean"]) * params["bn_gamma"] * inv + params["bn_beta"]
    x_fc1 = jnp.dot(x_bn, params["w1"],
                    precision=lax.Precision.HIGHEST) + params["b1"]
    x_final = jnp.dot(x_fc1, params["w2"],
                      precision=lax.Precision.HIGHEST) + params["b2"]
    return x_final, x_fc1, x_bn, x_avg, emb, emb


if __name__ == "__main__":
    # Small shapes consistent with the module (LT forward implies filter_num == word_dim).
    vocab_size = 50
    word_dim = 32
    filter_num = word_dim
    max_len = 8
    num_classes = 4
    batch = 10                      # not a tile multiple -> exercises padding path

    key = jax.random.PRNGKey(0)
    ks = jax.random.split(key, 9)

    emb = 0.1 * jax.random.normal(ks[0], (vocab_size + 2, word_dim), jnp.float32)
    emb = emb.at[vocab_size + 1].set(0.0)   # padding_idx row is zero

    params = {
        "embedding": emb,
        "bn_gamma": 1.0 + 0.1 * jax.random.normal(ks[1], (filter_num,), jnp.float32),
        "bn_beta": 0.1 * jax.random.normal(ks[2], (filter_num,), jnp.float32),
        "bn_mean": 0.1 * jax.random.normal(ks[3], (filter_num,), jnp.float32),
        "bn_var": jax.nn.softplus(jax.random.normal(ks[4], (filter_num,), jnp.float32)) + 0.5,
        "w1": 0.1 * jax.random.normal(ks[5], (filter_num, filter_num), jnp.float32),
        "b1": 0.1 * jax.random.normal(ks[6], (filter_num,), jnp.float32),
        "w2": 0.1 * jax.random.normal(ks[7], (filter_num, num_classes), jnp.float32),
        "b2": 0.1 * jax.random.normal(ks[8], (num_classes,), jnp.float32),
    }

    word_idx = jax.random.randint(jax.random.PRNGKey(1), (batch, max_len),
                                  0, vocab_size, dtype=jnp.int32)

    # block_b=8 forces a multi-step "parallel" grid even at this tiny size.
    outs = textcnn_lt_forward(word_idx, params, block_b=8)
    outs = jax.block_until_ready(outs)

    refs = _reference(word_idx, params)
    names = ("x_final", "x_fc1", "x_avg_bn", "x_avg", "x_feat_perm", "raw_feature")
    for name, o, r in zip(names, outs, refs):
        if not jnp.allclose(o, r, atol=1e-4, rtol=1e-4):
            raise AssertionError(f"Pallas kernel output mismatch vs reference: {name}")

    print("KERNEL_OK")
</pallas_src>

<mosaic_0001>
module attributes {stable_mosaic.version = 11 : i64} {
  func.func @textcnn_lt_kernel(%arg0: i32, %arg1: memref<8x8xi32, #tpu.memory_space<vmem>>, %arg2: memref<52x32xf32, #tpu.memory_space<vmem>>, %arg3: memref<1x32xf32, #tpu.memory_space<vmem>>, %arg4: memref<1x32xf32, #tpu.memory_space<vmem>>, %arg5: memref<32x32xf32, #tpu.memory_space<vmem>>, %arg6: memref<1x32xf32, #tpu.memory_space<vmem>>, %arg7: memref<32x4xf32, #tpu.memory_space<vmem>>, %arg8: memref<1x4xf32, #tpu.memory_space<vmem>>, %arg9: memref<8x4xf32, #tpu.memory_space<vmem>>, %arg10: memref<8x32xf32, #tpu.memory_space<vmem>>, %arg11: memref<8x32xf32, #tpu.memory_space<vmem>>, %arg12: memref<8x32xf32, #tpu.memory_space<vmem>>, %arg13: memref<8x8x32xf32, #tpu.memory_space<vmem>>) attributes {dimension_semantics = [#tpu.dimension_semantics<parallel>], iteration_bounds = array<i64: 2>, scalar_prefetch = 0 : i64, scratch_operands = 0 : i64, tpu.core_type = #tpu.core_type<tc>, window_params = [{transform_indices = @transform_0, window_bounds = array<i64: 8, 8>}, {pipeline_mode = #tpu.pipeline_mode<synchronous>, transform_indices = @transform_1, window_bounds = array<i64: 52, 32>}, {pipeline_mode = #tpu.pipeline_mode<synchronous>, transform_indices = @transform_2, window_bounds = array<i64: 1, 32>}, {pipeline_mode = #tpu.pipeline_mode<synchronous>, transform_indices = @transform_3, window_bounds = array<i64: 1, 32>}, {pipeline_mode = #tpu.pipeline_mode<synchronous>, transform_indices = @transform_4, window_bounds = array<i64: 32, 32>}, {pipeline_mode = #tpu.pipeline_mode<synchronous>, transform_indices = @transform_5, window_bounds = array<i64: 1, 32>}, {pipeline_mode = #tpu.pipeline_mode<synchronous>, transform_indices = @transform_6, window_bounds = array<i64: 32, 4>}, {pipeline_mode = #tpu.pipeline_mode<synchronous>, transform_indices = @transform_7, window_bounds = array<i64: 1, 4>}, {transform_indices = @transform_8, window_bounds = array<i64: 8, 4>}, {transform_indices = @transform_9, window_bounds = array<i64: 8, 32>}, {transform_indices = @transform_10, window_bounds = array<i64: 8, 32>}, {transform_indices = @transform_11, window_bounds = array<i64: 8, 32>}, {transform_indices = @transform_12, window_bounds = array<i64: 8, 8, 32>}]} {
    %c0 = arith.constant 0 : index
    %c0_0 = arith.constant 0 : index
    %0 = vector.load %arg1[%c0, %c0_0] : memref<8x8xi32, #tpu.memory_space<vmem>>, vector<8x8xi32>
    %1 = tpu.iota {dimensions = array<i32: 2>} : vector<8x8x52xi32>
    %2 = vector.shape_cast %0 : vector<8x8xi32> to vector<8x8x1xi32>
    %3 = vector.broadcast %2 : vector<8x8x1xi32> to vector<8x8x52xi32>
    %4 = arith.cmpi eq, %3, %1 : vector<8x8x52xi32>
    %5 = arith.extui %4 : vector<8x8x52xi1> to vector<8x8x52xi32>
    %6 = arith.sitofp %5 : vector<8x8x52xi32> to vector<8x8x52xf32>
    %7 = vector.shape_cast %6 : vector<8x8x52xf32> to vector<64x52xf32>
    %c0_1 = arith.constant 0 : index
    %c0_2 = arith.constant 0 : index
    %8 = vector.load %arg2[%c0_1, %c0_2] : memref<52x32xf32, #tpu.memory_space<vmem>>, vector<52x32xf32>
    %cst = arith.constant dense<0.000000e+00> : vector<64x32xf32>
    %9 = tpu.matmul %7, %8, %cst {dimension_numbers = #tpu.dot_dimension_numbers<[1], [0], [0], [1], [0, 0, 1, 1], [], []>, precision = #tpu.contract_precision<fp32>} : vector<64x52xf32>, vector<52x32xf32>, vector<64x32xf32> -> vector<64x32xf32>
    %10 = vector.shape_cast %9 : vector<64x32xf32> to vector<8x8x32xf32>
    %c0_3 = arith.constant 0 : index
    %c0_4 = arith.constant 0 : index
    %c0_5 = arith.constant 0 : index
    %11 = vector.load %arg13[%c0_3, %c0_4, %c0_5] : memref<8x8x32xf32, #tpu.memory_space<vmem>>, vector<8x8x32xf32>
    tpu.vector_store %arg13[%c0_3, %c0_4, %c0_5], %10 {strides = array<i32>} : memref<8x8x32xf32, #tpu.memory_space<vmem>>, vector<8x8x32xf32>,
    %cst_6 = arith.constant dense<0.000000e+00> : vector<8x32xf32>
    %12 = vector.multi_reduction <add>, %10, %cst_6 [1] : vector<8x8x32xf32> to vector<8x32xf32>
    %cst_7 = arith.constant 8.000000e+00 : f32
    %13 = vector.broadcast %cst_7 : f32 to vector<8x32xf32>
    %14 = arith.divf %12, %13 : vector<8x32xf32>
    %c0_8 = arith.constant 0 : index
    %c0_9 = arith.constant 0 : index
    %15 = vector.load %arg12[%c0_8, %c0_9] : memref<8x32xf32, #tpu.memory_space<vmem>>, vector<8x32xf32>
    tpu.vector_store %arg12[%c0_8, %c0_9], %14 {strides = array<i32>} : memref<8x32xf32, #tpu.memory_space<vmem>>, vector<8x32xf32>,
    %c0_10 = arith.constant 0 : index
    %c0_11 = arith.constant 0 : index
    %16 = vector.load %arg3[%c0_10, %c0_11] : memref<1x32xf32, #tpu.memory_space<vmem>>, vector<1x32xf32>
    %17 = vector.broadcast %16 : vector<1x32xf32> to vector<8x32xf32>
    %18 = arith.mulf %14, %17 : vector<8x32xf32>
    %c0_12 = arith.constant 0 : index
    %c0_13 = arith.constant 0 : index
    %19 = vector.load %arg4[%c0_12, %c0_13] : memref<1x32xf32, #tpu.memory_space<vmem>>, vector<1x32xf32>
    %20 = vector.broadcast %19 : vector<1x32xf32> to vector<8x32xf32>
    %21 = arith.addf %18, %20 : vector<8x32xf32>
    %c0_14 = arith.constant 0 : index
    %c0_15 = arith.constant 0 : index
    %22 = vector.load %arg11[%c0_14, %c0_15] : memref<8x32xf32, #tpu.memory_space<vmem>>, vector<8x32xf32>
    tpu.vector_store %arg11[%c0_14, %c0_15], %21 {strides = array<i32>} : memref<8x32xf32, #tpu.memory_space<vmem>>, vector<8x32xf32>,
    %c0_16 = arith.constant 0 : index
    %c0_17 = arith.constant 0 : index
    %23 = vector.load %arg5[%c0_16, %c0_17] : memref<32x32xf32, #tpu.memory_space<vmem>>, vector<32x32xf32>
    %cst_18 = arith.constant dense<0.000000e+00> : vector<8x32xf32>
    %24 = tpu.matmul %21, %23, %cst_18 {dimension_numbers = #tpu.dot_dimension_numbers<[1], [0], [0], [1], [0, 0, 1, 1], [], []>, precision = #tpu.contract_precision<fp32>} : vector<8x32xf32>, vector<32x32xf32>, vector<8x32xf32> -> vector<8x32xf32>
    %c0_19 = arith.constant 0 : index
    %c0_20 = arith.constant 0 : index
    %25 = vector.load %arg6[%c0_19, %c0_20] : memref<1x32xf32, #tpu.memory_space<vmem>>, vector<1x32xf32>
    %26 = vector.broadcast %25 : vector<1x32xf32> to vector<8x32xf32>
    %27 = arith.addf %24, %26 : vector<8x32xf32>
    %c0_21 = arith.constant 0 : index
    %c0_22 = arith.constant 0 : index
    %28 = vector.load %arg10[%c0_21, %c0_22] : memref<8x32xf32, #tpu.memory_space<vmem>>, vector<8x32xf32>
    tpu.vector_store %arg10[%c0_21, %c0_22], %27 {strides = array<i32>} : memref<8x32xf32, #tpu.memory_space<vmem>>, vector<8x32xf32>,
    %c0_23 = arith.constant 0 : index
    %c0_24 = arith.constant 0 : index
    %29 = vector.load %arg7[%c0_23, %c0_24] : memref<32x4xf32, #tpu.memory_space<vmem>>, vector<32x4xf32>
    %cst_25 = arith.constant dense<0.000000e+00> : vector<8x4xf32>
    %30 = tpu.matmul %27, %29, %cst_25 {dimension_numbers = #tpu.dot_dimension_numbers<[1], [0], [0], [1], [0, 0, 1, 1], [], []>, precision = #tpu.contract_precision<fp32>} : vector<8x32xf32>, vector<32x4xf32>, vector<8x4xf32> -> vector<8x4xf32>
    %c0_26 = arith.constant 0 : index
    %c0_27 = arith.constant 0 : index
    %31 = vector.load %arg8[%c0_26, %c0_27] : memref<1x4xf32, #tpu.memory_space<vmem>>, vector<1x4xf32>
    %32 = vector.broadcast %31 : vector<1x4xf32> to vector<8x4xf32>
    %33 = arith.addf %30, %32 : vector<8x4xf32>
    %c0_28 = arith.constant 0 : index
    %c0_29 = arith.constant 0 : index
    %34 = vector.load %arg9[%c0_28, %c0_29] : memref<8x4xf32, #tpu.memory_space<vmem>>, vector<8x4xf32>
    tpu.vector_store %arg9[%c0_28, %c0_29], %33 {strides = array<i32>} : memref<8x4xf32, #tpu.memory_space<vmem>>, vector<8x4xf32>,
    return
  }
  func.func @transform_0(%arg0: i32) -> (i32, i32) {
    %c0_i32 = arith.constant 0 : i32
    %c0_i32_0 = arith.constant 0 : i32
    return %arg0, %c0_i32 : i32, i32
  }
  func.func @transform_1(%arg0: i32) -> (i32, i32) {
    %c0_i32 = arith.constant 0 : i32
    %c0_i32_0 = arith.constant 0 : i32
    %c0_i32_1 = arith.constant 0 : i32
    return %c0_i32, %c0_i32_0 : i32, i32
  }
  func.func @transform_2(%arg0: i32) -> (i32, i32) {
    %c0_i32 = arith.constant 0 : i32
    %c0_i32_0 = arith.constant 0 : i32
    %c0_i32_1 = arith.constant 0 : i32
    return %c0_i32, %c0_i32_0 : i32, i32
  }
  func.func @transform_3(%arg0: i32) -> (i32, i32) {
    %c0_i32 = arith.constant 0 : i32
    %c0_i32_0 = arith.constant 0 : i32
    %c0_i32_1 = arith.constant 0 : i32
    return %c0_i32, %c0_i32_0 : i32, i32
  }
  func.func @transform_4(%arg0: i32) -> (i32, i32) {
    %c0_i32 = arith.constant 0 : i32
    %c0_i32_0 = arith.constant 0 : i32
    %c0_i32_1 = arith.constant 0 : i32
    return %c0_i32, %c0_i32_0 : i32, i32
  }
  func.func @transform_5(%arg0: i32) -> (i32, i32) {
    %c0_i32 = arith.constant 0 : i32
    %c0_i32_0 = arith.constant 0 : i32
    %c0_i32_1 = arith.constant 0 : i32
    return %c0_i32, %c0_i32_0 : i32, i32
  }
  func.func @transform_6(%arg0: i32) -> (i32, i32) {
    %c0_i32 = arith.constant 0 : i32
    %c0_i32_0 = arith.constant 0 : i32
    %c0_i32_1 = arith.constant 0 : i32
    return %c0_i32, %c0_i32_0 : i32, i32
  }
  func.func @transform_7(%arg0: i32) -> (i32, i32) {
    %c0_i32 = arith.constant 0 : i32
    %c0_i32_0 = arith.constant 0 : i32
    %c0_i32_1 = arith.constant 0 : i32
    return %c0_i32, %c0_i32_0 : i32, i32
  }
  func.func @transform_8(%arg0: i32) -> (i32, i32) {
    %c0_i32 = arith.constant 0 : i32
    %c0_i32_0 = arith.constant 0 : i32
    return %arg0, %c0_i32 : i32, i32
  }
  func.func @transform_9(%arg0: i32) -> (i32, i32) {
    %c0_i32 = arith.constant 0 : i32
    %c0_i32_0 = arith.constant 0 : i32
    return %arg0, %c0_i32 : i32, i32
  }
  func.func @transform_10(%arg0: i32) -> (i32, i32) {
    %c0_i32 = arith.constant 0 : i32
    %c0_i32_0 = arith.constant 0 : i32
    return %arg0, %c0_i32 : i32, i32
  }
  func.func @transform_11(%arg0: i32) -> (i32, i32) {
    %c0_i32 = arith.constant 0 : i32
    %c0_i32_0 = arith.constant 0 : i32
    return %arg0, %c0_i32 : i32, i32
  }
  func.func @transform_12(%arg0: i32) -> (i32, i32, i32) {
    %c0_i32 = arith.constant 0 : i32
    %c0_i32_0 = arith.constant 0 : i32
    %c0_i32_1 = arith.constant 0 : i32
    return %arg0, %c0_i32, %c0_i32_0 : i32, i32, i32
  }
}

</mosaic_0001>

<llo_original>
// kernel: tpu_custom_call.1
$region0: #{tpu_custom_call.1}
  #allocation0 [shape = 'u32[]', space=smem, size = 0x4, offset = 0x4, fixed_abs, tag = 'smem constant byte address 0x4 - core index']
  #allocation1 [shape = 'u32[144,128]{1,0:T(1,128)}', space=vmem, size = 0x12000, scoped, tag = 'internal scratch']
  %s0 = inlined_call_operand.vmem [shape: s32[16,8], index: 0, kind: input, shape index: {}]
  %s1 = inlined_call_operand.vmem [shape: f32[52,32], index: 1, kind: input, shape index: {}]
  %s2 = inlined_call_operand.vmem [shape: f32[1,32], index: 2, kind: input, shape index: {}]
  %s3 = inlined_call_operand.vmem [shape: f32[1,32], index: 3, kind: input, shape index: {}]
  %s4 = inlined_call_operand.vmem [shape: f32[32,32], index: 4, kind: input, shape index: {}]
  %s5 = inlined_call_operand.vmem [shape: f32[1,32], index: 5, kind: input, shape index: {}]
  %s6 = inlined_call_operand.vmem [shape: f32[32,4], index: 6, kind: input, shape index: {}]
  %s7 = inlined_call_operand.vmem [shape: f32[1,4], index: 7, kind: input, shape index: {}]
  %s8 = inlined_call_operand.vmem [shape: f32[16,4], index: 8, kind: output, shape index: {0}]
  %s9 = inlined_call_operand.hbm [shape: f32[16,32], index: 9, kind: output, shape index: {1}]
  %s10 = inlined_call_operand.hbm [shape: f32[16,32], index: 10, kind: output, shape index: {2}]
  %s11 = inlined_call_operand.hbm [shape: f32[16,32], index: 11, kind: output, shape index: {3}]
  %s12 = inlined_call_operand.hbm [shape: f32[16,8,32], index: 12, kind: output, shape index: {4}]
  %13 = xla_tuple %s8, %s9, %s10, %s11, %s12
  %s14 = sld [smem:[#allocation0]]
  $region97: #{tpu_custom_call.1} parent=0
    _
  %s16 = ssub.s32 1, %s14
  %s17 = scalar_select 0, %s16, %s14
  $region1: #{tpu_custom_call.1} parent=0
    #allocation2 [shape = 'u8[8192]{0}', space=vmem, size = 0x2000, scoped, tag = 'output window, operand 1']
    #allocation3 [shape = 's32[2]{0}', space=sflag, size = 0x8, scoped, tag = 'scoped memory for tpu_custom_call.1']
    #allocation4 [shape = 'u8[8192]{0}', space=vmem, size = 0x2000, scoped, tag = 'output window, operand 2']
    #allocation5 [shape = 's32[2]{0}', space=sflag, size = 0x8, scoped, tag = 'scoped memory for tpu_custom_call.1']
    #allocation6 [shape = 'u8[8192]{0}', space=vmem, size = 0x2000, scoped, tag = 'output window, operand 3']
    #allocation7 [shape = 'u8[65536]{0}', space=vmem, size = 0x10000, scoped, tag = 'output window, operand 4']
    #allocation8 [shape = 's32[2]{0}', space=sflag, size = 0x8, scoped, tag = 'scoped memory for tpu_custom_call.1']
    %18 = vsyncpa [#allocation3], 0
    %s19 = scalar_lea.sflag [#allocation3], 1
    %20 = vsyncpa %s19, 0
    %21 = vsyncpa [#allocation5], 0
    %s22 = scalar_lea.sflag [#allocation5], 1
    %23 = vsyncpa %s22, 0
    %24 = vsyncpa [#allocation8], 0
    %s25 = scalar_lea.sflag [#allocation8], 1
    %26 = vsyncpa %s25, 0
    loop: start=0, step=1, limit=4
    $region2: #{tpu_custom_call.1} parent=1 // loop_pre_header
      _
    $region3: #{tpu_custom_call.1} parent=1 // loop_header
      %s28 = sphi 0, %s32
      %p29 = scmp.ge.s32.totalorder %s28, 4
      %s38 = sphi 0, %s40
      %s41 = sphi 0, %s38
      %s42 = sphi 0, %s41
      %s58 = sphi 0, %s42
      %s62 = sphi 0, %s62
      %s64 = sphi 0, %s62
      %s65 = sphi 0, %s64
      %s79 = sphi 0, %s65
      %s83 = sphi 0, %s83
      %s85 = sphi 0, %s83
      %s86 = sphi 0, %s85
      %s100 = sphi 0, %s86
      %s104 = sphi 0, %s104
      %s106 = sphi 0, %s104
      %s107 = sphi 0, %s106
      %s121 = sphi 0, %s107
      %s125 = sphi 0, %s125
      %s127 = sphi 0, %s125
      %s128 = sphi 0, %s127
      %s142 = sphi 0, %s128
      %s146 = sphi 0, %s146
      %s148 = sphi 0, %s146
      %s149 = sphi 0, %s148
      %s163 = sphi 0, %s149
      %s167 = sphi 0, %s167
      %s169 = sphi 0, %s167
      %s170 = sphi 0, %s169
      %s184 = sphi 0, %s170
      %s188 = sphi 0, %s188
      %s190 = sphi 0, %s188
      %s191 = sphi 0, %s190
      %s205 = sphi 0, %s191
      %s211 = sphi 0, %s213
      %s214 = sphi 0, %s211
      %s215 = sphi 0, %s214
      %s231 = sphi 0, %s215
      %s237 = sphi 0, %s239
      %s240 = sphi 0, %s237
      %s241 = sphi 0, %s240
      %s257 = sphi 0, %s241
      %s263 = sphi 0, %s265
      %s266 = sphi 0, %s263
      %s267 = sphi 0, %s266
      %s283 = sphi 0, %s267
      %s289 = sphi 0, %s291
      %s292 = sphi 0, %s289
      %s293 = sphi 0, %s292
      %s309 = sphi 0, %s293
      %s315 = sphi 0, %s317
      %s318 = sphi 0, %s315
      %s319 = sphi 0, %s318
      %s335 = sphi 0, %s319
    $region4: #{tpu_custom_call.1} parent=1 // loop_header_branch
      %31 = sbr.rel (%p29) target = $region8
    $region5: #{tpu_custom_call.1} parent=1 // loop_body
      %s33 = ssub.s32 %s28, 1
      %s34 = ssub.s32 %s28, 2
      %s35 = sadd.s32 %s28, 1
      %s36 = ssub.s32 %s28, %s35
      %p37 = scmp.eq.s32.totalorder %s36, 0
      %s39 = sadd.s32 %s38, 1
      %s40 = scalar_select %p37, %s38, %s39
      %p43 = pneg %p37
      %p44 = scmp.eq.s32.totalorder %s28, 1
      %p45 = por %p43, %p44
      %p46 = scmp.ne.s32.totalorder %s38, %s41
      %p47 = scmp.eq.s32.totalorder %s28, 0
      %p48 = por %p46, %p47
      %p49 = scmp.ne.s32.totalorder %s38, %s41
      %p50 = scmp.eq.s32.totalorder %s33, 1
      %p51 = por %p49, %p50
      %p52 = scmp.ne.s32.totalorder %s41, %s42
      %p53 = scmp.eq.s32.totalorder %s33, 0
      %p54 = por %p52, %p53
      %p55 = scmp.ne.s32.totalorder %s41, %s42
      %p56 = scmp.eq.s32.totalorder %s34, 1
      %p57 = por %p55, %p56
      %p59 = scmp.ne.s32.totalorder %s42, %s58
      %p60 = scmp.eq.s32.totalorder %s34, 0
      %p61 = por %p59, %p60
      %s63 = sadd.s32 %s62, 1
      %p66 = scmp.eq.s32.totalorder %s28, 1
      %p67 = scmp.ne.s32.totalorder %s62, %s64
      %p68 = scmp.eq.s32.totalorder %s28, 0
      %p69 = por %p67, %p68
      %p70 = scmp.ne.s32.totalorder %s62, %s64
      %p71 = scmp.eq.s32.totalorder %s33, 1
      %p72 = por %p70, %p71
      %p73 = scmp.ne.s32.totalorder %s64, %s65
      %p74 = scmp.eq.s32.totalorder %s33, 0
      %p75 = por %p73, %p74
      %p76 = scmp.ne.s32.totalorder %s64, %s65
      %p77 = scmp.eq.s32.totalorder %s34, 1
      %p78 = por %p76, %p77
      %p80 = scmp.ne.s32.totalorder %s65, %s79
      %p81 = scmp.eq.s32.totalorder %s34, 0
      %p82 = por %p80, %p81
      %s84 = sadd.s32 %s83, 1
      %p87 = scmp.eq.s32.totalorder %s28, 1
      %p88 = scmp.ne.s32.totalorder %s83, %s85
      %p89 = scmp.eq.s32.totalorder %s28, 0
      %p90 = por %p88, %p89
      %p91 = scmp.ne.s32.totalorder %s83, %s85
      %p92 = scmp.eq.s32.totalorder %s33, 1
      %p93 = por %p91, %p92
      %p94 = scmp.ne.s32.totalorder %s85, %s86
      %p95 = scmp.eq.s32.totalorder %s33, 0
      %p96 = por %p94, %p95
      %p97 = scmp.ne.s32.totalorder %s85, %s86
      %p98 = scmp.eq.s32.totalorder %s34, 1
      %p99 = por %p97, %p98
      %p101 = scmp.ne.s32.totalorder %s86, %s100
      %p102 = scmp.eq.s32.totalorder %s34, 0
      %p103 = por %p101, %p102
      %s105 = sadd.s32 %s104, 1
      %p108 = scmp.eq.s32.totalorder %s28, 1
      %p109 = scmp.ne.s32.totalorder %s104, %s106
      %p110 = scmp.eq.s32.totalorder %s28, 0
      %p111 = por %p109, %p110
      %p112 = scmp.ne.s32.totalorder %s104, %s106
      %p113 = scmp.eq.s32.totalorder %s33, 1
      %p114 = por %p112, %p113
      %p115 = scmp.ne.s32.totalorder %s106, %s107
      %p116 = scmp.eq.s32.totalorder %s33, 0
      %p117 = por %p115, %p116
      %p118 = scmp.ne.s32.totalorder %s106, %s107
      %p119 = scmp.eq.s32.totalorder %s34, 1
      %p120 = por %p118, %p119
      %p122 = scmp.ne.s32.totalorder %s107, %s121
      %p123 = scmp.eq.s32.totalorder %s34, 0
      %p124 = por %p122, %p123
      %s126 = sadd.s32 %s125, 1
      %p129 = scmp.eq.s32.totalorder %s28, 1
      %p130 = scmp.ne.s32.totalorder %s125, %s127
      %p131 = scmp.eq.s32.totalorder %s28, 0
      %p132 = por %p130, %p131
      %p133 = scmp.ne.s32.totalorder %s125, %s127
      %p134 = scmp.eq.s32.totalorder %s33, 1
      %p135 = por %p133, %p134
      %p136 = scmp.ne.s32.totalorder %s127, %s128
      %p137 = scmp.eq.s32.totalorder %s33, 0
      %p138 = por %p136, %p137
      %p139 = scmp.ne.s32.totalorder %s127, %s128
      %p140 = scmp.eq.s32.totalorder %s34, 1
      %p141 = por %p139, %p140
      %p143 = scmp.ne.s32.totalorder %s128, %s142
      %p144 = scmp.eq.s32.totalorder %s34, 0
      %p145 = por %p143, %p144
      %s147 = sadd.s32 %s146, 1
      %p150 = scmp.eq.s32.totalorder %s28, 1
      %p151 = scmp.ne.s32.totalorder %s146, %s148
      %p152 = scmp.eq.s32.totalorder %s28, 0
      %p153 = por %p151, %p152
      %p154 = scmp.ne.s32.totalorder %s146, %s148
      %p155 = scmp.eq.s32.totalorder %s33, 1
      %p156 = por %p154, %p155
      %p157 = scmp.ne.s32.totalorder %s148, %s149
      %p158 = scmp.eq.s32.totalorder %s33, 0
      %p159 = por %p157, %p158
      %p160 = scmp.ne.s32.totalorder %s148, %s149
      %p161 = scmp.eq.s32.totalorder %s34, 1
      %p162 = por %p160, %p161
      %p164 = scmp.ne.s32.totalorder %s149, %s163
      %p165 = scmp.eq.s32.totalorder %s34, 0
      %p166 = por %p164, %p165
      %s168 = sadd.s32 %s167, 1
      %p171 = scmp.eq.s32.totalorder %s28, 1
      %p172 = scmp.ne.s32.totalorder %s167, %s169
      %p173 = scmp.eq.s32.totalorder %s28, 0
      %p174 = por %p172, %p173
      %p175 = scmp.ne.s32.totalorder %s167, %s169
      %p176 = scmp.eq.s32.totalorder %s33, 1
      %p177 = por %p175, %p176
      %p178 = scmp.ne.s32.totalorder %s169, %s170
      %p179 = scmp.eq.s32.totalorder %s33, 0
      %p180 = por %p178, %p179
      %p181 = scmp.ne.s32.totalorder %s169, %s170
      %p182 = scmp.eq.s32.totalorder %s34, 1
      %p183 = por %p181, %p182
      %p185 = scmp.ne.s32.totalorder %s170, %s184
      %p186 = scmp.eq.s32.totalorder %s34, 0
      %p187 = por %p185, %p186
      %s189 = sadd.s32 %s188, 1
      %p192 = scmp.eq.s32.totalorder %s28, 1
      %p193 = scmp.ne.s32.totalorder %s188, %s190
      %p194 = scmp.eq.s32.totalorder %s28, 0
      %p195 = por %p193, %p194
      %p196 = scmp.ne.s32.totalorder %s188, %s190
      %p197 = scmp.eq.s32.totalorder %s33, 1
      %p198 = por %p196, %p197
      %p199 = scmp.ne.s32.totalorder %s190, %s191
      %p200 = scmp.eq.s32.totalorder %s33, 0
      %p201 = por %p199, %p200
      %p202 = scmp.ne.s32.totalorder %s190, %s191
      %p203 = scmp.eq.s32.totalorder %s34, 1
      %p204 = por %p202, %p203
      %p206 = scmp.ne.s32.totalorder %s191, %s205
      %p207 = scmp.eq.s32.totalorder %s34, 0
      %p208 = por %p206, %p207
      %s209 = ssub.s32 %s28, %s35
      %p210 = scmp.eq.s32.totalorder %s209, 0
      %s212 = sadd.s32 %s211, 1
      %s213 = scalar_select %p210, %s211, %s212
      %p216 = pneg %p210
      %p217 = scmp.eq.s32.totalorder %s28, 1
      %p218 = por %p216, %p217
      %p219 = scmp.ne.s32.totalorder %s211, %s214
      %p220 = scmp.eq.s32.totalorder %s28, 0
      %p221 = por %p219, %p220
      %p222 = scmp.ne.s32.totalorder %s211, %s214
      %p223 = scmp.eq.s32.totalorder %s33, 1
      %p224 = por %p222, %p223
      %p225 = scmp.ne.s32.totalorder %s214, %s215
      %p226 = scmp.eq.s32.totalorder %s33, 0
      %p227 = por %p225, %p226
      %p228 = scmp.ne.s32.totalorder %s214, %s215
      %p229 = scmp.eq.s32.totalorder %s34, 1
      %p230 = por %p228, %p229
      %p232 = scmp.ne.s32.totalorder %s215, %s231
      %p233 = scmp.eq.s32.totalorder %s34, 0
      %p234 = por %p232, %p233
      %s235 = ssub.s32 %s28, %s35
      %p236 = scmp.eq.s32.totalorder %s235, 0
      %s238 = sadd.s32 %s237, 1
      %s239 = scalar_select %p236, %s237, %s238
      %p242 = pneg %p236
      %p243 = scmp.eq.s32.totalorder %s28, 1
      %p244 = por %p242, %p243
      %p245 = scmp.ne.s32.totalorder %s237, %s240
      %p246 = scmp.eq.s32.totalorder %s28, 0
      %p247 = por %p245, %p246
      %p248 = scmp.ne.s32.totalorder %s237, %s240
      %p249 = scmp.eq.s32.totalorder %s33, 1
      %p250 = por %p248, %p249
      %p251 = scmp.ne.s32.totalorder %s240, %s241
      %p252 = scmp.eq.s32.totalorder %s33, 0
      %p253 = por %p251, %p252
      %p254 = scmp.ne.s32.totalorder %s240, %s241
      %p255 = scmp.eq.s32.totalorder %s34, 1
      %p256 = por %p254, %p255
      %p258 = scmp.ne.s32.totalorder %s241, %s257
      %p259 = scmp.eq.s32.totalorder %s34, 0
      %p260 = por %p258, %p259
      %s261 = ssub.s32 %s28, %s35
      %p262 = scmp.eq.s32.totalorder %s261, 0
      %s264 = sadd.s32 %s263, 1
      %s265 = scalar_select %p262, %s263, %s264
      %p268 = pneg %p262
      %p269 = scmp.eq.s32.totalorder %s28, 1
      %p270 = por %p268, %p269
      %p271 = scmp.ne.s32.totalorder %s263, %s266
      %p272 = scmp.eq.s32.totalorder %s28, 0
      %p273 = por %p271, %p272
      %p274 = scmp.ne.s32.totalorder %s263, %s266
      %p275 = scmp.eq.s32.totalorder %s33, 1
      %p276 = por %p274, %p275
      %p277 = scmp.ne.s32.totalorder %s266, %s267
      %p278 = scmp.eq.s32.totalorder %s33, 0
      %p279 = por %p277, %p278
      %p280 = scmp.ne.s32.totalorder %s266, %s267
      %p281 = scmp.eq.s32.totalorder %s34, 1
      %p282 = por %p280, %p281
      %p284 = scmp.ne.s32.totalorder %s267, %s283
      %p285 = scmp.eq.s32.totalorder %s34, 0
      %p286 = por %p284, %p285
      %s287 = ssub.s32 %s28, %s35
      %p288 = scmp.eq.s32.totalorder %s287, 0
      %s290 = sadd.s32 %s289, 1
      %s291 = scalar_select %p288, %s289, %s290
      %p294 = pneg %p288
      %p295 = scmp.eq.s32.totalorder %s28, 1
      %p296 = por %p294, %p295
      %p297 = scmp.ne.s32.totalorder %s289, %s292
      %p298 = scmp.eq.s32.totalorder %s28, 0
      %p299 = por %p297, %p298
      %p300 = scmp.ne.s32.totalorder %s289, %s292
      %p301 = scmp.eq.s32.totalorder %s33, 1
      %p302 = por %p300, %p301
      %p303 = scmp.ne.s32.totalorder %s292, %s293
      %p304 = scmp.eq.s32.totalorder %s33, 0
      %p305 = por %p303, %p304
      %p306 = scmp.ne.s32.totalorder %s292, %s293
      %p307 = scmp.eq.s32.totalorder %s34, 1
      %p308 = por %p306, %p307
      %p310 = scmp.ne.s32.totalorder %s293, %s309
      %p311 = scmp.eq.s32.totalorder %s34, 0
      %p312 = por %p310, %p311
      %s313 = ssub.s32 %s28, %s35
      %p314 = scmp.eq.s32.totalorder %s313, 0
      %s316 = sadd.s32 %s315, 1
      %s317 = scalar_select %p314, %s315, %s316
      %p320 = pneg %p314
      %p321 = scmp.eq.s32.totalorder %s28, 1
      %p322 = por %p320, %p321
      %p323 = scmp.ne.s32.totalorder %s315, %s318
      %p324 = scmp.eq.s32.totalorder %s28, 0
      %p325 = por %p323, %p324
      %p326 = scmp.ne.s32.totalorder %s315, %s318
      %p327 = scmp.eq.s32.totalorder %s33, 1
      %p328 = por %p326, %p327
      %p329 = scmp.ne.s32.totalorder %s318, %s319
      %p330 = scmp.eq.s32.totalorder %s33, 0
      %p331 = por %p329, %p330
      %p332 = scmp.ne.s32.totalorder %s318, %s319
      %p333 = scmp.eq.s32.totalorder %s34, 1
      %p334 = por %p332, %p333
      %p336 = scmp.ne.s32.totalorder %s319, %s335
      %p337 = scmp.eq.s32.totalorder %s34, 0
      %p338 = por %p336, %p337
      %p339 = scmp.le.s32.totalorder 1, %s28
      %p340 = scmp.lt.s32.totalorder %s28, 3
      %p341 = pnand %p339, %p340
      %p342 = pneg %p341
      // Predicated region
      $region9: #{tpu_custom_call.1} parent=5 // pred_check
        _
      $region10: #{tpu_custom_call.1} parent=5 // pred_check_branch
        %344 = sbr.rel (%p341) target = $region12
      $region11: #{tpu_custom_call.1} parent=5 // pred_region
        %s345 = ssub.s32 %s28, 1
        // Predicated region
        $region13: #{tpu_custom_call.1} parent=11 // pred_check
          %p346 = pneg %p75
        $region14: #{tpu_custom_call.1} parent=11 // pred_check_branch
          %348 = sbr.rel (%p346) target = $region16
        $region15: #{tpu_custom_call.1} parent=11 // pred_region
          _
        $region16: #{tpu_custom_call.1} parent=11 // pred_fallthru
          _
        // Predicated region
        $region17: #{tpu_custom_call.1} parent=11 // pred_check
          %p349 = pneg %p96
        $region18: #{tpu_custom_call.1} parent=11 // pred_check_branch
          %351 = sbr.rel (%p349) target = $region20
        $region19: #{tpu_custom_call.1} parent=11 // pred_region
          _
        $region20: #{tpu_custom_call.1} parent=11 // pred_fallthru
          _
        // Predicated region
        $region21: #{tpu_custom_call.1} parent=11 // pred_check
          %p352 = pneg %p117
        $region22: #{tpu_custom_call.1} parent=11 // pred_check_branch
          %354 = sbr.rel (%p352) target = $region24
        $region23: #{tpu_custom_call.1} parent=11 // pred_region
          _
        $region24: #{tpu_custom_call.1} parent=11 // pred_fallthru
          _
        // Predicated region
        $region25: #{tpu_custom_call.1} parent=11 // pred_check
          %p355 = pneg %p138
        $region26: #{tpu_custom_call.1} parent=11 // pred_check_branch
          %357 = sbr.rel (%p355) target = $region28
        $region27: #{tpu_custom_call.1} parent=11 // pred_region
          _
        $region28: #{tpu_custom_call.1} parent=11 // pred_fallthru
          _
        // Predicated region
        $region29: #{tpu_custom_call.1} parent=11 // pred_check
          %p358 = pneg %p159
        $region30: #{tpu_custom_call.1} parent=11 // pred_check_branch
          %360 = sbr.rel (%p358) target = $region32
        $region31: #{tpu_custom_call.1} parent=11 // pred_region
          _
        $region32: #{tpu_custom_call.1} parent=11 // pred_fallthru
          _
        // Predicated region
        $region33: #{tpu_custom_call.1} parent=11 // pred_check
          %p361 = pneg %p180
        $region34: #{tpu_custom_call.1} parent=11 // pred_check_branch
          %363 = sbr.rel (%p361) target = $region36
        $region35: #{tpu_custom_call.1} parent=11 // pred_region
          _
        $region36: #{tpu_custom_call.1} parent=11 // pred_fallthru
          _
        // Predicated region
        $region37: #{tpu_custom_call.1} parent=11 // pred_check
          %p364 = pneg %p201
        $region38: #{tpu_custom_call.1} parent=11 // pred_check_branch
          %366 = sbr.rel (%p364) target = $region40
        $region39: #{tpu_custom_call.1} parent=11 // pred_region
          _
        $region40: #{tpu_custom_call.1} parent=11 // pred_fallthru
          _
      $region12: #{tpu_custom_call.1} parent=5 // pred_fallthru
        _
      %p367 = scmp.lt.s32.totalorder %s28, 2
      // Predicated region
      $region41: #{tpu_custom_call.1} parent=5 // pred_check
        %p368 = pneg %p367
      $region42: #{tpu_custom_call.1} parent=5 // pred_check_branch
        %370 = sbr.rel (%p368) target = $region44
      $region43: #{tpu_custom_call.1} parent=5 // pred_region
        // Predicated region
        $region45: #{tpu_custom_call.1} parent=43 // pred_check
          %p371 = pneg %p48
        $region46: #{tpu_custom_call.1} parent=43 // pred_check_branch
          %373 = sbr.rel (%p371) target = $region48
        $region47: #{tpu_custom_call.1} parent=43 // pred_region
          %p374 = scmp.lt.s32.totalorder %s28, 1
          %s375 = scalar_select %p374, %s28, 1
          %s376 = smul.addr %s375, 8
          %s377 = scalar_lea.vmem %s0, %s376
        $region48: #{tpu_custom_call.1} parent=43 // pred_fallthru
          _
      $region44: #{tpu_custom_call.1} parent=5 // pred_fallthru
        _
      %p378 = scmp.le.s32.totalorder 1, %s28
      %p379 = scmp.lt.s32.totalorder %s28, 3
      %p380 = pnand %p378, %p379
      %p381 = pneg %p380
      // Predicated region
      $region49: #{tpu_custom_call.1} parent=5 // pred_check
        _
      $region50: #{tpu_custom_call.1} parent=5 // pred_check_branch
        %383 = sbr.rel (%p380) target = $region52
      $region51: #{tpu_custom_call.1} parent=5 // pred_region
        %s384 = ssub.s32 %s28, 1
        %p385 = scmp.lt.s32.totalorder %s33, 1
        %s386 = scalar_select %p385, %s33, 1
        %s387 = smul.addr %s386, 8
        %s388 = scalar_lea.vmem %s0, %s387
        %p389 = pneg %p54
        %p390 = pneg %p51
        %p391 = pneg %p75
        %p392 = pneg %p72
        %p393 = pneg %p96
        %p394 = pneg %p93
        %p395 = pneg %p117
        %p396 = pneg %p114
        %p397 = pneg %p138
        %p398 = pneg %p135
        %p399 = pneg %p159
        %p400 = pneg %p156
        %p401 = pneg %p180
        %p402 = pneg %p177
        %p403 = pneg %p201
        %p404 = pneg %p198
        %p405 = pneg %p227
        %p406 = pneg %p224
        %p407 = scmp.lt.s32.totalorder %s33, 1
        %s408 = scalar_select %p407, %s33, 1
        %s409 = smul.addr %s408, 8
        %s410 = scalar_lea.vmem %s8, %s409
        %p411 = pneg %p253
        %p412 = pneg %p250
        %s413 = sand.u32 %s240, 1
        %s414 = scalar_lea.sflag [#allocation3], %s413
        %s415 = sand.u32 %s240, 1
        %s416 = smul.addr %s415, 8
        %s417 = scalar_lea.vmem [#allocation2], %s416
        %p418 = pneg %p279
        %p419 = pneg %p276
        %s420 = sand.u32 %s33, 1
        %s421 = scalar_lea.sflag [#allocation5], %s420
        %s422 = sand.u32 %s266, 1
        %s423 = smul.addr %s422, 8
        %s424 = scalar_lea.vmem [#allocation4], %s423
        %p425 = pneg %p305
        %p426 = pneg %p302
        %s427 = sand.u32 %s33, 1
        %s428 = scalar_lea.sflag [#allocation5], %s427
        %s429 = sand.u32 %s292, 1
        %s430 = smul.addr %s429, 8
        %s431 = scalar_lea.vmem [#allocation6], %s430
        %p432 = pneg %p331
        %p433 = pneg %p328
        %s434 = sand.u32 %s318, 1
        %s435 = scalar_lea.sflag [#allocation8], %s434
        %s436 = sand.u32 %s318, 1
        %s437 = smul.addr %s436, 64
        %s438 = scalar_lea.vmem [#allocation7], %s437
        %p439 = scmp.lt.s32.totalorder %s33, 1
        %s440 = scalar_select %p439, %s33, 1
        %s441 = smul.addr %s440, 8
        %s442 = scalar_lea.vmem %s0, %s441
        %p443 = scmp.lt.s32.totalorder %s33, 1
        %s444 = scalar_select %p443, %s33, 1
        %s445 = smul.addr %s444, 8
        %s446 = scalar_lea.vmem %s8, %s445
        %s447 = smul.u32 8, %s33
        %v448 = vld [vmem:[%s442] sm:$0xff]
        %v449 = vlaneseq
        %v450 = vand.u32 %v449, 127
        %v451 = vlaneseq
        %v452 = vshrl.u32 %v451, 7
        %v453 = vsub.s32 0, %v452
        %v454 = vrot.slane %v448, %v453
        %456 = vbcast.lane.b32.xlu0 %v454, 256
        %v457 = vpop.permute.xlu0 %456
        %v458 = vlaneseq
        %v459 = vshrl.u32 %v458, 7
        %v460 = vsub.s32 1, %v459
        %v461 = vrot.slane %v448, %v460
        %463 = vbcast.lane.b32.xlu0 %v461, 256
        %v464 = vpop.permute.xlu0 %463
        %v465 = vlaneseq
        %v466 = vshrl.u32 %v465, 7
        %v467 = vsub.s32 2, %v466
        %v468 = vrot.slane %v448, %v467
        %470 = vbcast.lane.b32.xlu0 %v468, 256
        %v471 = vpop.permute.xlu0 %470
        %v472 = vlaneseq
        %v473 = vshrl.u32 %v472, 7
        %v474 = vsub.s32 3, %v473
        %v475 = vrot.slane %v448, %v474
        %477 = vbcast.lane.b32.xlu0 %v475, 256
        %v478 = vpop.permute.xlu0 %477
        %v479 = vlaneseq
        %v480 = vshrl.u32 %v479, 7
        %v481 = vsub.s32 4, %v480
        %v482 = vrot.slane %v448, %v481
        %484 = vbcast.lane.b32.xlu0 %v482, 256
        %v485 = vpop.permute.xlu0 %484
        %v486 = vlaneseq
        %v487 = vshrl.u32 %v486, 7
        %v488 = vsub.s32 5, %v487
        %v489 = vrot.slane %v448, %v488
        %491 = vbcast.lane.b32.xlu0 %v489, 256
        %v492 = vpop.permute.xlu0 %491
        %v493 = vlaneseq
        %v494 = vshrl.u32 %v493, 7
        %v495 = vsub.s32 6, %v494
        %v496 = vrot.slane %v448, %v495
        %498 = vbcast.lane.b32.xlu0 %v496, 256
        %v499 = vpop.permute.xlu0 %498
        %v500 = vlaneseq
        %v501 = vshrl.u32 %v500, 7
        %v502 = vsub.s32 7, %v501
        %v503 = vrot.slane %v448, %v502
        %505 = vbcast.lane.b32.xlu0 %v503, 256
        %v506 = vpop.permute.xlu0 %505
        %vm507 = vcmp.eq.s32.totalorder %v457, %v450
        %vm508 = vcmp.eq.s32.totalorder %v464, %v450
        %vm509 = vcmp.eq.s32.totalorder %v471, %v450
        %vm510 = vcmp.eq.s32.totalorder %v478, %v450
        %vm511 = vcmp.eq.s32.totalorder %v485, %v450
        %vm512 = vcmp.eq.s32.totalorder %v492, %v450
        %vm513 = vcmp.eq.s32.totalorder %v499, %v450
        %vm514 = vcmp.eq.s32.totalorder %v506, %v450
        %v515 = vsel %vm507, 1, 0
        %v516 = vsel %vm508, 1, 0
        %v517 = vsel %vm509, 1, 0
        %v518 = vsel %vm510, 1, 0
        %v519 = vsel %vm511, 1, 0
        %v520 = vsel %vm512, 1, 0
        %v521 = vsel %vm513, 1, 0
        %v522 = vsel %vm514, 1, 0
        %v523 = vcvt.s32.f32 %v515
        %v524 = vcvt.s32.f32 %v516
        %v525 = vcvt.s32.f32 %v517
        %v526 = vcvt.s32.f32 %v518
        %v527 = vcvt.s32.f32 %v519
        %v528 = vcvt.s32.f32 %v520
        %v529 = vcvt.s32.f32 %v521
        %v530 = vcvt.s32.f32 %v522
        %v531 = vld [vmem:[%s1] sm:$0xff]
        %v532 = vld [vmem:[%s1 + $0x8] sm:$0xff]
        %v533 = vld [vmem:[%s1 + $0x10] sm:$0xff]
        %v534 = vld [vmem:[%s1 + $0x18] sm:$0xff]
        %v535 = vld [vmem:[%s1 + $0x20] sm:$0xff]
        %v536 = vld [vmem:[%s1 + $0x28] sm:$0xff]
        %v537 = vld [vmem:[%s1 + $0x30] sm:$0xf]
        %vm538 = vcmask 424960
        %v540 = vsel %vm538, %v523, 0
        %v543 = vsel %vm538, %v524, 0
        %v546 = vsel %vm538, %v525, 0
        %v549 = vsel %vm538, %v526, 0
        %v552 = vsel %vm538, %v527, 0
        %v555 = vsel %vm538, %v528, 0
        %v558 = vsel %vm538, %v529, 0
        %v561 = vsel %vm538, %v530, 0
        %vm563 = vcmask 1043456
        %v565 = vsel %vm563, %v537, 0
        %567 = vmatprep.subr.mxu0 0.0
        %v568 = vand.u32 %v531, 4294901760
        %569 = vmatpush1.msra.mxu0 %v568
        %570 = vmatprep.subr.mxu0 0.0
        %v571 = vand.u32 %v532, 4294901760
        %572 = vmatpush1.msra.mxu0 %v571
        %573 = vmatprep.subr.mxu0 0.0
        %v574 = vand.u32 %v533, 4294901760
        %575 = vmatpush1.msra.mxu0 %v574
        %576 = vmatprep.subr.mxu0 0.0
        %v577 = vand.u32 %v534, 4294901760
        %578 = vmatpush1.msra.mxu0 %v577
        %579 = vmatprep.subr.mxu0 0.0
        %v580 = vand.u32 %v535, 4294901760
        %581 = vmatpush1.msra.mxu0 %v580
        %582 = vmatprep.subr.mxu0 0.0
        %v583 = vand.u32 %v536, 4294901760
        %584 = vmatpush1.msra.mxu0 %v583
        %585 = vmatprep.subr.mxu0 0.0
        %v586 = vand.u32 %v565, 4294901760
        %587 = vmatpush1.msra.mxu0 %v586
        %588 = vmatprep.subr.mxu0 0.0
        %589 = vmatpush1.msra.mxu0 0.0
        %590 = vmatprep.subr.mxu0 0.0
        %591 = vmatpush1.msra.mxu0 0.0
        %592 = vmatprep.subr.mxu0 0.0
        %593 = vmatpush1.msra.mxu0 0.0
        %594 = vmatprep.subr.mxu0 0.0
        %595 = vmatpush1.msra.mxu0 0.0
        %596 = vmatprep.subr.mxu0 0.0
        %597 = vmatpush1.msra.mxu0 0.0
        %598 = vmatprep.subr.mxu0 0.0
        %599 = vmatpush1.msra.mxu0 0.0
        %600 = vmatprep.subr.mxu0 0.0
        %601 = vmatpush1.msra.mxu0 0.0
        %602 = vmatprep.subr.mxu0 0.0
        %603 = vmatpush1.msra.mxu0 0.0
        %604 = vmatprep.subr.mxu0 0.0
        %605 = vmatpush1.msra.mxu0 0.0
        %606 = vmatprep.subr.mxu0 0.0
        %607 = vmatpush1.msra.mxu0 0.0
        %608 = vmatprep.subr.mxu0 0.0
        %609 = vmatpush1.msra.mxu0 0.0
        %610 = vmatprep.subr.mxu0 0.0
        %611 = vmatpush1.msra.mxu0 0.0
        %612 = vmatprep.subr.mxu0 0.0
        %613 = vmatpush1.msra.mxu0 0.0
        %614 = vmatprep.subr.mxu0 0.0
        %615 = vmatpush1.msra.mxu0 0.0
        %616 = vmatprep.subr.mxu0 0.0
        %617 = vmatpush1.msra.mxu0 0.0
        %618 = vmatprep.subr.mxu0 0.0
        %619 = vmatpush1.msra.mxu0 0.0
        %620 = vmatprep.subr.mxu0 0.0
        %621 = vmatpush1.msra.mxu0 0.0
        %622 = vmatprep.subr.mxu0 0.0
        %623 = vmatpush1.msra.mxu0 0.0
        %624 = vmatprep.subr.mxu0 0.0
        %625 = vmatpush1.msra.mxu0 0.0
        %626 = vmatprep.subr.mxu0 0.0
        %627 = vmatpush1.msra.mxu0 0.0
        %628 = vmatprep.subr.mxu0 0.0
        %629 = vmatpush1.msra.mxu0 0.0
        %630 = vmatprep.subr.mxu0 0.0
        %631 = vmatpush1.msra.mxu0 0.0
        %632 = vmatprep.subr.mxu0 0.0
        %633 = vmatpush1.msra.mxu0 0.0
        %634 = vmatprep.subr.mxu0 0.0
        %635 = vmatpush1.msra.mxu0 0.0
        %636 = vmatprep.subr.mxu0 0.0
        %637 = vmatpush1.msra.mxu0 0.0
        %638 = vmatprep.mubr.f32.mxu0 0.0
        %v639 = vand.u32 %v540, 4294901760
        %v640 = vsub.f32 %v540, %v639
        %v641 = vand.u32 %v640, 4294901760
        %v642 = vsub.f32 %v640, %v641
        %v643 = vand.u32 %v642, 4294901760
        %644 = vmatmul.mubr.f32.gmra.mrb[0].mxu0 %v643
        %v645 = vpop.f32.mrb[0].mxu0
        %v646 = vadd.f32 0.0, %v645
        %v647 = vpop.f32.mrb[0].mxu0
        %648 = vmatprep.mubr.f32.mxu0 0.0
        %v649 = vand.u32 %v543, 4294901760
        %v650 = vsub.f32 %v543, %v649
        %v651 = vand.u32 %v650, 4294901760
        %v652 = vsub.f32 %v650, %v651
        %v653 = vand.u32 %v652, 4294901760
        %654 = vmatmul.mubr.f32.gmra.mrb[0].mxu0 %v653
        %v655 = vpop.f32.mrb[0].mxu0
        %v656 = vadd.f32 0.0, %v655
        %v657 = vpop.f32.mrb[0].mxu0
        %658 = vmatprep.mubr.f32.mxu0 0.0
        %v659 = vand.u32 %v546, 4294901760
        %v660 = vsub.f32 %v546, %v659
        %v661 = vand.u32 %v660, 4294901760
        %v662 = vsub.f32 %v660, %v661
        %v663 = vand.u32 %v662, 4294901760
        %664 = vmatmul.mubr.f32.gmra.mrb[0].mxu0 %v663
        %v665 = vpop.f32.mrb[0].mxu0
        %v666 = vadd.f32 0.0, %v665
        %v667 = vpop.f32.mrb[0].mxu0
        %668 = vmatprep.mubr.f32.mxu0 0.0
        %v669 = vand.u32 %v549, 4294901760
        %v670 = vsub.f32 %v549, %v669
        %v671 = vand.u32 %v670, 4294901760
        %v672 = vsub.f32 %v670, %v671
        %v673 = vand.u32 %v672, 4294901760
        %674 = vmatmul.mubr.f32.gmra.mrb[0].mxu0 %v673
        %v675 = vpop.f32.mrb[0].mxu0
        %v676 = vadd.f32 0.0, %v675
        %v677 = vpop.f32.mrb[0].mxu0
        %678 = vmatprep.mubr.f32.mxu0 0.0
        %v679 = vand.u32 %v552, 4294901760
        %v680 = vsub.f32 %v552, %v679
        %v681 = vand.u32 %v680, 4294901760
        %v682 = vsub.f32 %v680, %v681
        %v683 = vand.u32 %v682, 4294901760
        %684 = vmatmul.mubr.f32.gmra.mrb[0].mxu0 %v683
        %v685 = vpop.f32.mrb[0].mxu0
        %v686 = vadd.f32 0.0, %v685
        %v687 = vpop.f32.mrb[0].mxu0
        %688 = vmatprep.mubr.f32.mxu0 0.0
        %v689 = vand.u32 %v555, 4294901760
        %v690 = vsub.f32 %v555, %v689
        %v691 = vand.u32 %v690, 4294901760
        %v692 = vsub.f32 %v690, %v691
        %v693 = vand.u32 %v692, 4294901760
        %694 = vmatmul.mubr.f32.gmra.mrb[0].mxu0 %v693
        %v695 = vpop.f32.mrb[0].mxu0
        %v696 = vadd.f32 0.0, %v695
        %v697 = vpop.f32.mrb[0].mxu0
        %698 = vmatprep.mubr.f32.mxu0 0.0
        %v699 = vand.u32 %v558, 4294901760
        %v700 = vsub.f32 %v558, %v699
        %v701 = vand.u32 %v700, 4294901760
        %v702 = vsub.f32 %v700, %v701
        %v703 = vand.u32 %v702, 4294901760
        %704 = vmatmul.mubr.f32.gmra.mrb[0].mxu0 %v703
        %v705 = vpop.f32.mrb[0].mxu0
        %v706 = vadd.f32 0.0, %v705
        %v707 = vpop.f32.mrb[0].mxu0
        %708 = vmatprep.mubr.f32.mxu0 0.0
        %v709 = vand.u32 %v561, 4294901760
        %v710 = vsub.f32 %v561, %v709
        %v711 = vand.u32 %v710, 4294901760
        %v712 = vsub.f32 %v710, %v711
        %v713 = vand.u32 %v712, 4294901760
        %714 = vmatmul.mubr.f32.gmra.mrb[0].mxu0 %v713
        %v715 = vpop.f32.mrb[0].mxu0
        %v716 = vadd.f32 0.0, %v715
        %v717 = vpop.f32.mrb[0].mxu0
        %718 = vdwg.mxu0
        %719 = vmatprep.subr.mxu0 0.0
        %v720 = vand.u32 %v531, 4294901760
        %v721 = vsub.f32 %v531, %v720
        %v722 = vand.u32 %v721, 4294901760
        %v723 = vsub.f32 %v721, %v722
        %v724 = vand.u32 %v723, 4294901760
        %725 = vmatpush1.msra.mxu0 %v724
        %726 = vmatprep.subr.mxu0 0.0
        %v727 = vand.u32 %v532, 4294901760
        %v728 = vsub.f32 %v532, %v727
        %v729 = vand.u32 %v728, 4294901760
        %v730 = vsub.f32 %v728, %v729
        %v731 = vand.u32 %v730, 4294901760
        %732 = vmatpush1.msra.mxu0 %v731
        %733 = vmatprep.subr.mxu0 0.0
        %v734 = vand.u32 %v533, 4294901760
        %v735 = vsub.f32 %v533, %v734
        %v736 = vand.u32 %v735, 4294901760
        %v737 = vsub.f32 %v735, %v736
        %v738 = vand.u32 %v737, 4294901760
        %739 = vmatpush1.msra.mxu0 %v738
        %740 = vmatprep.subr.mxu0 0.0
        %v741 = vand.u32 %v534, 4294901760
        %v742 = vsub.f32 %v534, %v741
        %v743 = vand.u32 %v742, 4294901760
        %v744 = vsub.f32 %v742, %v743
        %v745 = vand.u32 %v744, 4294901760
        %746 = vmatpush1.msra.mxu0 %v745
        %747 = vmatprep.subr.mxu0 0.0
        %v748 = vand.u32 %v535, 4294901760
        %v749 = vsub.f32 %v535, %v748
        %v750 = vand.u32 %v749, 4294901760
        %v751 = vsub.f32 %v749, %v750
        %v752 = vand.u32 %v751, 4294901760
        %753 = vmatpush1.msra.mxu0 %v752
        %754 = vmatprep.subr.mxu0 0.0
        %v755 = vand.u32 %v536, 4294901760
        %v756 = vsub.f32 %v536, %v755
        %v757 = vand.u32 %v756, 4294901760
        %v758 = vsub.f32 %v756, %v757
        %v759 = vand.u32 %v758, 4294901760
        %760 = vmatpush1.msra.mxu0 %v759
        %761 = vmatprep.subr.mxu0 0.0
        %v762 = vand.u32 %v565, 4294901760
        %v763 = vsub.f32 %v565, %v762
        %v764 = vand.u32 %v763, 4294901760
        %v765 = vsub.f32 %v763, %v764
        %v766 = vand.u32 %v765, 4294901760
        %767 = vmatpush1.msra.mxu0 %v766
        %768 = vmatprep.subr.mxu0 0.0
        %769 = vmatpush1.msra.mxu0 0.0
        %770 = vmatprep.subr.mxu0 0.0
        %771 = vmatpush1.msra.mxu0 0.0
        %772 = vmatprep.subr.mxu0 0.0
        %773 = vmatpush1.msra.mxu0 0.0
        %774 = vmatprep.subr.mxu0 0.0
        %775 = vmatpush1.msra.mxu0 0.0
        %776 = vmatprep.subr.mxu0 0.0
        %777 = vmatpush1.msra.mxu0 0.0
        %778 = vmatprep.subr.mxu0 0.0
        %779 = vmatpush1.msra.mxu0 0.0
        %780 = vmatprep.subr.mxu0 0.0
        %781 = vmatpush1.msra.mxu0 0.0
        %782 = vmatprep.subr.mxu0 0.0
        %783 = vmatpush1.msra.mxu0 0.0
        %784 = vmatprep.subr.mxu0 0.0
        %785 = vmatpush1.msra.mxu0 0.0
        %786 = vmatprep.subr.mxu0 0.0
        %787 = vmatpush1.msra.mxu0 0.0
        %788 = vmatprep.subr.mxu0 0.0
        %789 = vmatpush1.msra.mxu0 0.0
        %790 = vmatprep.subr.mxu0 0.0
        %791 = vmatpush1.msra.mxu0 0.0
        %792 = vmatprep.subr.mxu0 0.0
        %793 = vmatpush1.msra.mxu0 0.0
        %794 = vmatprep.subr.mxu0 0.0
        %795 = vmatpush1.msra.mxu0 0.0
        %796 = vmatprep.subr.mxu0 0.0
        %797 = vmatpush1.msra.mxu0 0.0
        %798 = vmatprep.subr.mxu0 0.0
        %799 = vmatpush1.msra.mxu0 0.0
        %800 = vmatprep.subr.mxu0 0.0
        %801 = vmatpush1.msra.mxu0 0.0
        %802 = vmatprep.subr.mxu0 0.0
        %803 = vmatpush1.msra.mxu0 0.0
        %804 = vmatprep.subr.mxu0 0.0
        %805 = vmatpush1.msra.mxu0 0.0
        %806 = vmatprep.subr.mxu0 0.0
        %807 = vmatpush1.msra.mxu0 0.0
        %808 = vmatprep.subr.mxu0 0.0
        %809 = vmatpush1.msra.mxu0 0.0
        %810 = vmatprep.subr.mxu0 0.0
        %811 = vmatpush1.msra.mxu0 0.0
        %812 = vmatprep.subr.mxu0 0.0
        %813 = vmatpush1.msra.mxu0 0.0
        %814 = vmatprep.subr.mxu0 0.0
        %815 = vmatpush1.msra.mxu0 0.0
        %816 = vmatprep.subr.mxu0 0.0
        %817 = vmatpush1.msra.mxu0 0.0
        %818 = vmatprep.mubr.f32.mxu0 0.0
        %v819 = vand.u32 %v540, 4294901760
        %820 = vmatmul.mubr.f32.gmra.mrb[0].mxu0 %v819
        %v821 = vpop.f32.mrb[0].mxu0
        %v822 = vadd.f32 %v646, %v821
        %v823 = vpop.f32.mrb[0].mxu0
        %824 = vmatprep.mubr.f32.mxu0 0.0
        %v825 = vand.u32 %v543, 4294901760
        %826 = vmatmul.mubr.f32.gmra.mrb[0].mxu0 %v825
        %v827 = vpop.f32.mrb[0].mxu0
        %v828 = vadd.f32 %v656, %v827
        %v829 = vpop.f32.mrb[0].mxu0
        %830 = vmatprep.mubr.f32.mxu0 0.0
        %v831 = vand.u32 %v546, 4294901760
        %832 = vmatmul.mubr.f32.gmra.mrb[0].mxu0 %v831
        %v833 = vpop.f32.mrb[0].mxu0
        %v834 = vadd.f32 %v666, %v833
        %v835 = vpop.f32.mrb[0].mxu0
        %836 = vmatprep.mubr.f32.mxu0 0.0
        %v837 = vand.u32 %v549, 4294901760
        %838 = vmatmul.mubr.f32.gmra.mrb[0].mxu0 %v837
        %v839 = vpop.f32.mrb[0].mxu0
        %v840 = vadd.f32 %v676, %v839
        %v841 = vpop.f32.mrb[0].mxu0
        %842 = vmatprep.mubr.f32.mxu0 0.0
        %v843 = vand.u32 %v552, 4294901760
        %844 = vmatmul.mubr.f32.gmra.mrb[0].mxu0 %v843
        %v845 = vpop.f32.mrb[0].mxu0
        %v846 = vadd.f32 %v686, %v845
        %v847 = vpop.f32.mrb[0].mxu0
        %848 = vmatprep.mubr.f32.mxu0 0.0
        %v849 = vand.u32 %v555, 4294901760
        %850 = vmatmul.mubr.f32.gmra.mrb[0].mxu0 %v849
        %v851 = vpop.f32.mrb[0].mxu0
        %v852 = vadd.f32 %v696, %v851
        %v853 = vpop.f32.mrb[0].mxu0
        %854 = vmatprep.mubr.f32.mxu0 0.0
        %v855 = vand.u32 %v558, 4294901760
        %856 = vmatmul.mubr.f32.gmra.mrb[0].mxu0 %v855
        %v857 = vpop.f32.mrb[0].mxu0
        %v858 = vadd.f32 %v706, %v857
        %v859 = vpop.f32.mrb[0].mxu0
        %860 = vmatprep.mubr.f32.mxu0 0.0
        %v861 = vand.u32 %v561, 4294901760
        %862 = vmatmul.mubr.f32.gmra.mrb[0].mxu0 %v861
        %v863 = vpop.f32.mrb[0].mxu0
        %v864 = vadd.f32 %v716, %v863
        %v865 = vpop.f32.mrb[0].mxu0
        %866 = vdwg.mxu0
        %867 = vmatprep.subr.mxu0 0.0
        %v868 = vand.u32 %v531, 4294901760
        %v869 = vsub.f32 %v531, %v868
        %870 = vmatpush1.msra.mxu0 %v869
        %871 = vmatprep.subr.mxu0 0.0
        %v872 = vand.u32 %v532, 4294901760
        %v873 = vsub.f32 %v532, %v872
        %874 = vmatpush1.msra.mxu0 %v873
        %875 = vmatprep.subr.mxu0 0.0
        %v876 = vand.u32 %v533, 4294901760
        %v877 = vsub.f32 %v533, %v876
        %878 = vmatpush1.msra.mxu0 %v877
        %879 = vmatprep.subr.mxu0 0.0
        %v880 = vand.u32 %v534, 4294901760
        %v881 = vsub.f32 %v534, %v880
        %882 = vmatpush1.msra.mxu0 %v881
        %883 = vmatprep.subr.mxu0 0.0
        %v884 = vand.u32 %v535, 4294901760
        %v885 = vsub.f32 %v535, %v884
        %886 = vmatpush1.msra.mxu0 %v885
        %887 = vmatprep.subr.mxu0 0.0
        %v888 = vand.u32 %v536, 4294901760
        %v889 = vsub.f32 %v536, %v888
        %890 = vmatpush1.msra.mxu0 %v889
        %891 = vmatprep.subr.mxu0 0.0
        %v892 = vand.u32 %v565, 4294901760
        %v893 = vsub.f32 %v565, %v892
        %894 = vmatpush1.msra.mxu0 %v893
        %895 = vmatprep.subr.mxu0 0.0
        %896 = vmatpush1.msra.mxu0 0.0
        %897 = vmatprep.subr.mxu0 0.0
        %898 = vmatpush1.msra.mxu0 0.0
        %899 = vmatprep.subr.mxu0 0.0
        %900 = vmatpush1.msra.mxu0 0.0
        %901 = vmatprep.subr.mxu0 0.0
        %902 = vmatpush1.msra.mxu0 0.0
        %903 = vmatprep.subr.mxu0 0.0
        %904 = vmatpush1.msra.mxu0 0.0
        %905 = vmatprep.subr.mxu0 0.0
        %906 = vmatpush1.msra.mxu0 0.0
        %907 = vmatprep.subr.mxu0 0.0
        %908 = vmatpush1.msra.mxu0 0.0
        %909 = vmatprep.subr.mxu0 0.0
        %910 = vmatpush1.msra.mxu0 0.0
        %911 = vmatprep.subr.mxu0 0.0
        %912 = vmatpush1.msra.mxu0 0.0
        %913 = vmatprep.subr.mxu0 0.0
        %914 = vmatpush1.msra.mxu0 0.0
        %915 = vmatprep.subr.mxu0 0.0
        %916 = vmatpush1.msra.mxu0 0.0
        %917 = vmatprep.subr.mxu0 0.0
        %918 = vmatpush1.msra.mxu0 0.0
        %919 = vmatprep.subr.mxu0 0.0
        %920 = vmatpush1.msra.mxu0 0.0
        %921 = vmatprep.subr.mxu0 0.0
        %922 = vmatpush1.msra.mxu0 0.0
        %923 = vmatprep.subr.mxu0 0.0
        %924 = vmatpush1.msra.mxu0 0.0
        %925 = vmatprep.subr.mxu0 0.0
        %926 = vmatpush1.msra.mxu0 0.0
        %927 = vmatprep.subr.mxu0 0.0
        %928 = vmatpush1.msra.mxu0 0.0
        %929 = vmatprep.subr.mxu0 0.0
        %930 = vmatpush1.msra.mxu0 0.0
        %931 = vmatprep.subr.mxu0 0.0
        %932 = vmatpush1.msra.mxu0 0.0
        %933 = vmatprep.subr.mxu0 0.0
        %934 = vmatpush1.msra.mxu0 0.0
        %935 = vmatprep.subr.mxu0 0.0
        %936 = vmatpush1.msra.mxu0 0.0
        %937 = vmatprep.subr.mxu0 0.0
        %938 = vmatpush1.msra.mxu0 0.0
        %939 = vmatprep.subr.mxu0 0.0
        %940 = vmatpush1.msra.mxu0 0.0
        %941 = vmatprep.subr.mxu0 0.0
        %942 = vmatpush1.msra.mxu0 0.0
        %943 = vmatprep.subr.mxu0 0.0
        %944 = vmatpush1.msra.mxu0 0.0
        %945 = vmatprep.mubr.f32.mxu0 0.0
        %v946 = vand.u32 %v540, 4294901760
        %v947 = vsub.f32 %v540, %v946
        %948 = vmatmul.mubr.f32.gmra.mrb[0].mxu0 %v947
        %v949 = vpop.f32.mrb[0].mxu0
        %v950 = vadd.f32 %v822, %v949
        %v951 = vpop.f32.mrb[0].mxu0
        %952 = vmatprep.mubr.f32.mxu0 0.0
        %v953 = vand.u32 %v543, 4294901760
        %v954 = vsub.f32 %v543, %v953
        %955 = vmatmul.mubr.f32.gmra.mrb[0].mxu0 %v954
        %v956 = vpop.f32.mrb[0].mxu0
        %v957 = vadd.f32 %v828, %v956
        %v958 = vpop.f32.mrb[0].mxu0
        %959 = vmatprep.mubr.f32.mxu0 0.0
        %v960 = vand.u32 %v546, 4294901760
        %v961 = vsub.f32 %v546, %v960
        %962 = vmatmul.mubr.f32.gmra.mrb[0].mxu0 %v961
        %v963 = vpop.f32.mrb[0].mxu0
        %v964 = vadd.f32 %v834, %v963
        %v965 = vpop.f32.mrb[0].mxu0
        %966 = vmatprep.mubr.f32.mxu0 0.0
        %v967 = vand.u32 %v549, 4294901760
        %v968 = vsub.f32 %v549, %v967
        %969 = vmatmul.mubr.f32.gmra.mrb[0].mxu0 %v968
        %v970 = vpop.f32.mrb[0].mxu0
        %v971 = vadd.f32 %v840, %v970
        %v972 = vpop.f32.mrb[0].mxu0
        %973 = vmatprep.mubr.f32.mxu0 0.0
        %v974 = vand.u32 %v552, 4294901760
        %v975 = vsub.f32 %v552, %v974
        %976 = vmatmul.mubr.f32.gmra.mrb[0].mxu0 %v975
        %v977 = vpop.f32.mrb[0].mxu0
        %v978 = vadd.f32 %v846, %v977
        %v979 = vpop.f32.mrb[0].mxu0
        %980 = vmatprep.mubr.f32.mxu0 0.0
        %v981 = vand.u32 %v555, 4294901760
        %v982 = vsub.f32 %v555, %v981
        %983 = vmatmul.mubr.f32.gmra.mrb[0].mxu0 %v982
        %v984 = vpop.f32.mrb[0].mxu0
        %v985 = vadd.f32 %v852, %v984
        %v986 = vpop.f32.mrb[0].mxu0
        %987 = vmatprep.mubr.f32.mxu0 0.0
        %v988 = vand.u32 %v558, 4294901760
        %v989 = vsub.f32 %v558, %v988
        %990 = vmatmul.mubr.f32.gmra.mrb[0].mxu0 %v989
        %v991 = vpop.f32.mrb[0].mxu0
        %v992 = vadd.f32 %v858, %v991
        %v993 = vpop.f32.mrb[0].mxu0
        %994 = vmatprep.mubr.f32.mxu0 0.0
        %v995 = vand.u32 %v561, 4294901760
        %v996 = vsub.f32 %v561, %v995
        %997 = vmatmul.mubr.f32.gmra.mrb[0].mxu0 %v996
        %v998 = vpop.f32.mrb[0].mxu0
        %v999 = vadd.f32 %v864, %v998
        %v1000 = vpop.f32.mrb[0].mxu0
        %1001 = vdwg.mxu0
        %1002 = vmatprep.subr.mxu0 0.0
        %v1003 = vand.u32 %v531, 4294901760
        %1004 = vmatpush1.msra.mxu0 %v1003
        %1005 = vmatprep.subr.mxu0 0.0
        %v1006 = vand.u32 %v532, 4294901760
        %1007 = vmatpush1.msra.mxu0 %v1006
        %1008 = vmatprep.subr.mxu0 0.0
        %v1009 = vand.u32 %v533, 4294901760
        %1010 = vmatpush1.msra.mxu0 %v1009
        %1011 = vmatprep.subr.mxu0 0.0
        %v1012 = vand.u32 %v534, 4294901760
        %1013 = vmatpush1.msra.mxu0 %v1012
        %1014 = vmatprep.subr.mxu0 0.0
        %v1015 = vand.u32 %v535, 4294901760
        %1016 = vmatpush1.msra.mxu0 %v1015
        %1017 = vmatprep.subr.mxu0 0.0
        %v1018 = vand.u32 %v536, 4294901760
        %1019 = vmatpush1.msra.mxu0 %v1018
        %1020 = vmatprep.subr.mxu0 0.0
        %v1021 = vand.u32 %v565, 4294901760
        %1022 = vmatpush1.msra.mxu0 %v1021
        %1023 = vmatprep.subr.mxu0 0.0
        %1024 = vmatpush1.msra.mxu0 0.0
        %1025 = vmatprep.subr.mxu0 0.0
        %1026 = vmatpush1.msra.mxu0 0.0
        %1027 = vmatprep.subr.mxu0 0.0
        %1028 = vmatpush1.msra.mxu0 0.0
        %1029 = vmatprep.subr.mxu0 0.0
        %1030 = vmatpush1.msra.mxu0 0.0
        %1031 = vmatprep.subr.mxu0 0.0
        %1032 = vmatpush1.msra.mxu0 0.0
        %1033 = vmatprep.subr.mxu0 0.0
        %1034 = vmatpush1.msra.mxu0 0.0
        %1035 = vmatprep.subr.mxu0 0.0
        %1036 = vmatpush1.msra.mxu0 0.0
        %1037 = vmatprep.subr.mxu0 0.0
        %1038 = vmatpush1.msra.mxu0 0.0
        %1039 = vmatprep.subr.mxu0 0.0
        %1040 = vmatpush1.msra.mxu0 0.0
        %1041 = vmatprep.subr.mxu0 0.0
        %1042 = vmatpush1.msra.mxu0 0.0
        %1043 = vmatprep.subr.mxu0 0.0
        %1044 = vmatpush1.msra.mxu0 0.0
        %1045 = vmatprep.subr.mxu0 0.0
        %1046 = vmatpush1.msra.mxu0 0.0
        %1047 = vmatprep.subr.mxu0 0.0
        %1048 = vmatpush1.msra.mxu0 0.0
        %1049 = vmatprep.subr.mxu0 0.0
        %1050 = vmatpush1.msra.mxu0 0.0
        %1051 = vmatprep.subr.mxu0 0.0
        %1052 = vmatpush1.msra.mxu0 0.0
        %1053 = vmatprep.subr.mxu0 0.0
        %1054 = vmatpush1.msra.mxu0 0.0
        %1055 = vmatprep.subr.mxu0 0.0
        %1056 = vmatpush1.msra.mxu0 0.0
        %1057 = vmatprep.subr.mxu0 0.0
        %1058 = vmatpush1.msra.mxu0 0.0
        %1059 = vmatprep.subr.mxu0 0.0
        %1060 = vmatpush1.msra.mxu0 0.0
        %1061 = vmatprep.subr.mxu0 0.0
        %1062 = vmatpush1.msra.mxu0 0.0
        %1063 = vmatprep.subr.mxu0 0.0
        %1064 = vmatpush1.msra.mxu0 0.0
        %1065 = vmatprep.subr.mxu0 0.0
        %1066 = vmatpush1.msra.mxu0 0.0
        %1067 = vmatprep.subr.mxu0 0.0
        %1068 = vmatpush1.msra.mxu0 0.0
        %1069 = vmatprep.subr.mxu0 0.0
        %1070 = vmatpush1.msra.mxu0 0.0
        %1071 = vmatprep.subr.mxu0 0.0
        %1072 = vmatpush1.msra.mxu0 0.0
        %1073 = vmatprep.mubr.f32.mxu0 0.0
        %v1074 = vand.u32 %v540, 4294901760
        %v1075 = vsub.f32 %v540, %v1074
        %v1076 = vand.u32 %v1075, 4294901760
        %1077 = vmatmul.mubr.f32.gmra.mrb[0].mxu0 %v1076
        %v1078 = vpop.f32.mrb[0].mxu0
        %v1079 = vadd.f32 %v950, %v1078
        %v1080 = vpop.f32.mrb[0].mxu0
        %1081 = vmatprep.mubr.f32.mxu0 0.0
        %v1082 = vand.u32 %v543, 4294901760
        %v1083 = vsub.f32 %v543, %v1082
        %v1084 = vand.u32 %v1083, 4294901760
        %1085 = vmatmul.mubr.f32.gmra.mrb[0].mxu0 %v1084
        %v1086 = vpop.f32.mrb[0].mxu0
        %v1087 = vadd.f32 %v957, %v1086
        %v1088 = vpop.f32.mrb[0].mxu0
        %1089 = vmatprep.mubr.f32.mxu0 0.0
        %v1090 = vand.u32 %v546, 4294901760
        %v1091 = vsub.f32 %v546, %v1090
        %v1092 = vand.u32 %v1091, 4294901760
        %1093 = vmatmul.mubr.f32.gmra.mrb[0].mxu0 %v1092
        %v1094 = vpop.f32.mrb[0].mxu0
        %v1095 = vadd.f32 %v964, %v1094
        %v1096 = vpop.f32.mrb[0].mxu0
        %1097 = vmatprep.mubr.f32.mxu0 0.0
        %v1098 = vand.u32 %v549, 4294901760
        %v1099 = vsub.f32 %v549, %v1098
        %v1100 = vand.u32 %v1099, 4294901760
        %1101 = vmatmul.mubr.f32.gmra.mrb[0].mxu0 %v1100
        %v1102 = vpop.f32.mrb[0].mxu0
        %v1103 = vadd.f32 %v971, %v1102
        %v1104 = vpop.f32.mrb[0].mxu0
        %1105 = vmatprep.mubr.f32.mxu0 0.0
        %v1106 = vand.u32 %v552, 4294901760
        %v1107 = vsub.f32 %v552, %v1106
        %v1108 = vand.u32 %v1107, 4294901760
        %1109 = vmatmul.mubr.f32.gmra.mrb[0].mxu0 %v1108
        %v1110 = vpop.f32.mrb[0].mxu0
        %v1111 = vadd.f32 %v978, %v1110
        %v1112 = vpop.f32.mrb[0].mxu0
        %1113 = vmatprep.mubr.f32.mxu0 0.0
        %v1114 = vand.u32 %v555, 4294901760
        %v1115 = vsub.f32 %v555, %v1114
        %v1116 = vand.u32 %v1115, 4294901760
        %1117 = vmatmul.mubr.f32.gmra.mrb[0].mxu0 %v1116
        %v1118 = vpop.f32.mrb[0].mxu0
        %v1119 = vadd.f32 %v985, %v1118
        %v1120 = vpop.f32.mrb[0].mxu0
        %1121 = vmatprep.mubr.f32.mxu0 0.0
        %v1122 = vand.u32 %v558, 4294901760
        %v1123 = vsub.f32 %v558, %v1122
        %v1124 = vand.u32 %v1123, 4294901760
        %1125 = vmatmul.mubr.f32.gmra.mrb[0].mxu0 %v1124
        %v1126 = vpop.f32.mrb[0].mxu0
        %v1127 = vadd.f32 %v992, %v1126
        %v1128 = vpop.f32.mrb[0].mxu0
        %1129 = vmatprep.mubr.f32.mxu0 0.0
        %v1130 = vand.u32 %v561, 4294901760
        %v1131 = vsub.f32 %v561, %v1130
        %v1132 = vand.u32 %v1131, 4294901760
        %1133 = vmatmul.mubr.f32.gmra.mrb[0].mxu0 %v1132
        %v1134 = vpop.f32.mrb[0].mxu0
        %v1135 = vadd.f32 %v999, %v1134
        %v1136 = vpop.f32.mrb[0].mxu0
        %1137 = vdwg.mxu0
        %1138 = vmatprep.subr.mxu0 0.0
        %v1139 = vand.u32 %v531, 4294901760
        %v1140 = vsub.f32 %v531, %v1139
        %v1141 = vand.u32 %v1140, 4294901760
        %1142 = vmatpush1.msra.mxu0 %v1141
        %1143 = vmatprep.subr.mxu0 0.0
        %v1144 = vand.u32 %v532, 4294901760
        %v1145 = vsub.f32 %v532, %v1144
        %v1146 = vand.u32 %v1145, 4294901760
        %1147 = vmatpush1.msra.mxu0 %v1146
        %1148 = vmatprep.subr.mxu0 0.0
        %v1149 = vand.u32 %v533, 4294901760
        %v1150 = vsub.f32 %v533, %v1149
        %v1151 = vand.u32 %v1150, 4294901760
        %1152 = vmatpush1.msra.mxu0 %v1151
        %1153 = vmatprep.subr.mxu0 0.0
        %v1154 = vand.u32 %v534, 4294901760
        %v1155 = vsub.f32 %v534, %v1154
        %v1156 = vand.u32 %v1155, 4294901760
        %1157 = vmatpush1.msra.mxu0 %v1156
        %1158 = vmatprep.subr.mxu0 0.0
        %v1159 = vand.u32 %v535, 4294901760
        %v1160 = vsub.f32 %v535, %v1159
        %v1161 = vand.u32 %v1160, 4294901760
        %1162 = vmatpush1.msra.mxu0 %v1161
        %1163 = vmatprep.subr.mxu0 0.0
        %v1164 = vand.u32 %v536, 4294901760
        %v1165 = vsub.f32 %v536, %v1164
        %v1166 = vand.u32 %v1165, 4294901760
        %1167 = vmatpush1.msra.mxu0 %v1166
        %1168 = vmatprep.subr.mxu0 0.0
        %v1169 = vand.u32 %v565, 4294901760
        %v1170 = vsub.f32 %v565, %v1169
        %v1171 = vand.u32 %v1170, 4294901760
        %1172 = vmatpush1.msra.mxu0 %v1171
        %1173 = vmatprep.subr.mxu0 0.0
        %1174 = vmatpush1.msra.mxu0 0.0
        %1175 = vmatprep.subr.mxu0 0.0
        %1176 = vmatpush1.msra.mxu0 0.0
        %1177 = vmatprep.subr.mxu0 0.0
        %1178 = vmatpush1.msra.mxu0 0.0
        %1179 = vmatprep.subr.mxu0 0.0
        %1180 = vmatpush1.msra.mxu0 0.0
        %1181 = vmatprep.subr.mxu0 0.0
        %1182 = vmatpush1.msra.mxu0 0.0
        %1183 = vmatprep.subr.mxu0 0.0
        %1184 = vmatpush1.msra.mxu0 0.0
        %1185 = vmatprep.subr.mxu0 0.0
        %1186 = vmatpush1.msra.mxu0 0.0
        %1187 = vmatprep.subr.mxu0 0.0
        %1188 = vmatpush1.msra.mxu0 0.0
        %1189 = vmatprep.subr.mxu0 0.0
        %1190 = vmatpush1.msra.mxu0 0.0
        %1191 = vmatprep.subr.mxu0 0.0
        %1192 = vmatpush1.msra.mxu0 0.0
        %1193 = vmatprep.subr.mxu0 0.0
        %1194 = vmatpush1.msra.mxu0 0.0
        %1195 = vmatprep.subr.mxu0 0.0
        %1196 = vmatpush1.msra.mxu0 0.0
        %1197 = vmatprep.subr.mxu0 0.0
        %1198 = vmatpush1.msra.mxu0 0.0
        %1199 = vmatprep.subr.mxu0 0.0
        %1200 = vmatpush1.msra.mxu0 0.0
        %1201 = vmatprep.subr.mxu0 0.0
        %1202 = vmatpush1.msra.mxu0 0.0
        %1203 = vmatprep.subr.mxu0 0.0
        %1204 = vmatpush1.msra.mxu0 0.0
        %1205 = vmatprep.subr.mxu0 0.0
        %1206 = vmatpush1.msra.mxu0 0.0
        %1207 = vmatprep.subr.mxu0 0.0
        %1208 = vmatpush1.msra.mxu0 0.0
        %1209 = vmatprep.subr.mxu0 0.0
        %1210 = vmatpush1.msra.mxu0 0.0
        %1211 = vmatprep.subr.mxu0 0.0
        %1212 = vmatpush1.msra.mxu0 0.0
        %1213 = vmatprep.subr.mxu0 0.0
        %1214 = vmatpush1.msra.mxu0 0.0
        %1215 = vmatprep.subr.mxu0 0.0
        %1216 = vmatpush1.msra.mxu0 0.0
        %1217 = vmatprep.subr.mxu0 0.0
        %1218 = vmatpush1.msra.mxu0 0.0
        %1219 = vmatprep.subr.mxu0 0.0
        %1220 = vmatpush1.msra.mxu0 0.0
        %1221 = vmatprep.subr.mxu0 0.0
        %1222 = vmatpush1.msra.mxu0 0.0
        %1223 = vmatprep.mubr.f32.mxu0 0.0
        %v1224 = vand.u32 %v540, 4294901760
        %1225 = vmatmul.mubr.f32.gmra.mrb[0].mxu0 %v1224
        %v1226 = vpop.f32.mrb[0].mxu0
        %v1227 = vadd.f32 %v1079, %v1226
        %v1228 = vpop.f32.mrb[0].mxu0
        %1229 = vmatprep.mubr.f32.mxu0 0.0
        %v1230 = vand.u32 %v543, 4294901760
        %1231 = vmatmul.mubr.f32.gmra.mrb[0].mxu0 %v1230
        %v1232 = vpop.f32.mrb[0].mxu0
        %v1233 = vadd.f32 %v1087, %v1232
        %v1234 = vpop.f32.mrb[0].mxu0
        %1235 = vmatprep.mubr.f32.mxu0 0.0
        %v1236 = vand.u32 %v546, 4294901760
        %1237 = vmatmul.mubr.f32.gmra.mrb[0].mxu0 %v1236
        %v1238 = vpop.f32.mrb[0].mxu0
        %v1239 = vadd.f32 %v1095, %v1238
        %v1240 = vpop.f32.mrb[0].mxu0
        %1241 = vmatprep.mubr.f32.mxu0 0.0
        %v1242 = vand.u32 %v549, 4294901760
        %1243 = vmatmul.mubr.f32.gmra.mrb[0].mxu0 %v1242
        %v1244 = vpop.f32.mrb[0].mxu0
        %v1245 = vadd.f32 %v1103, %v1244
        %v1246 = vpop.f32.mrb[0].mxu0
        %1247 = vmatprep.mubr.f32.mxu0 0.0
        %v1248 = vand.u32 %v552, 4294901760
        %1249 = vmatmul.mubr.f32.gmra.mrb[0].mxu0 %v1248
        %v1250 = vpop.f32.mrb[0].mxu0
        %v1251 = vadd.f32 %v1111, %v1250
        %v1252 = vpop.f32.mrb[0].mxu0
        %1253 = vmatprep.mubr.f32.mxu0 0.0
        %v1254 = vand.u32 %v555, 4294901760
        %1255 = vmatmul.mubr.f32.gmra.mrb[0].mxu0 %v1254
        %v1256 = vpop.f32.mrb[0].mxu0
        %v1257 = vadd.f32 %v1119, %v1256
        %v1258 = vpop.f32.mrb[0].mxu0
        %1259 = vmatprep.mubr.f32.mxu0 0.0
        %v1260 = vand.u32 %v558, 4294901760
        %1261 = vmatmul.mubr.f32.gmra.mrb[0].mxu0 %v1260
        %v1262 = vpop.f32.mrb[0].mxu0
        %v1263 = vadd.f32 %v1127, %v1262
        %v1264 = vpop.f32.mrb[0].mxu0
        %1265 = vmatprep.mubr.f32.mxu0 0.0
        %v1266 = vand.u32 %v561, 4294901760
        %1267 = vmatmul.mubr.f32.gmra.mrb[0].mxu0 %v1266
        %v1268 = vpop.f32.mrb[0].mxu0
        %v1269 = vadd.f32 %v1135, %v1268
        %v1270 = vpop.f32.mrb[0].mxu0
        %1271 = vdwg.mxu0
        %1272 = vmatprep.subr.mxu0 0.0
        %v1273 = vand.u32 %v531, 4294901760
        %1274 = vmatpush1.msra.mxu0 %v1273
        %1275 = vmatprep.subr.mxu0 0.0
        %v1276 = vand.u32 %v532, 4294901760
        %1277 = vmatpush1.msra.mxu0 %v1276
        %1278 = vmatprep.subr.mxu0 0.0
        %v1279 = vand.u32 %v533, 4294901760
        %1280 = vmatpush1.msra.mxu0 %v1279
        %1281 = vmatprep.subr.mxu0 0.0
        %v1282 = vand.u32 %v534, 4294901760
        %1283 = vmatpush1.msra.mxu0 %v1282
        %1284 = vmatprep.subr.mxu0 0.0
        %v1285 = vand.u32 %v535, 4294901760
        %1286 = vmatpush1.msra.mxu0 %v1285
        %1287 = vmatprep.subr.mxu0 0.0
        %v1288 = vand.u32 %v536, 4294901760
        %1289 = vmatpush1.msra.mxu0 %v1288
        %1290 = vmatprep.subr.mxu0 0.0
        %v1291 = vand.u32 %v565, 4294901760
        %1292 = vmatpush1.msra.mxu0 %v1291
        %1293 = vmatprep.subr.mxu0 0.0
        %1294 = vmatpush1.msra.mxu0 0.0
        %1295 = vmatprep.subr.mxu0 0.0
        %1296 = vmatpush1.msra.mxu0 0.0
        %1297 = vmatprep.subr.mxu0 0.0
        %1298 = vmatpush1.msra.mxu0 0.0
        %1299 = vmatprep.subr.mxu0 0.0
        %1300 = vmatpush1.msra.mxu0 0.0
        %1301 = vmatprep.subr.mxu0 0.0
        %1302 = vmatpush1.msra.mxu0 0.0
        %1303 = vmatprep.subr.mxu0 0.0
        %1304 = vmatpush1.msra.mxu0 0.0
        %1305 = vmatprep.subr.mxu0 0.0
        %1306 = vmatpush1.msra.mxu0 0.0
        %1307 = vmatprep.subr.mxu0 0.0
        %1308 = vmatpush1.msra.mxu0 0.0
        %1309 = vmatprep.subr.mxu0 0.0
        %1310 = vmatpush1.msra.mxu0 0.0
        %1311 = vmatprep.subr.mxu0 0.0
        %1312 = vmatpush1.msra.mxu0 0.0
        %1313 = vmatprep.subr.mxu0 0.0
        %1314 = vmatpush1.msra.mxu0 0.0
        %1315 = vmatprep.subr.mxu0 0.0
        %1316 = vmatpush1.msra.mxu0 0.0
        %1317 = vmatprep.subr.mxu0 0.0
        %1318 = vmatpush1.msra.mxu0 0.0
        %1319 = vmatprep.subr.mxu0 0.0
        %1320 = vmatpush1.msra.mxu0 0.0
        %1321 = vmatprep.subr.mxu0 0.0
        %1322 = vmatpush1.msra.mxu0 0.0
        %1323 = vmatprep.subr.mxu0 0.0
        %1324 = vmatpush1.msra.mxu0 0.0
        %1325 = vmatprep.subr.mxu0 0.0
        %1326 = vmatpush1.msra.mxu0 0.0
        %1327 = vmatprep.subr.mxu0 0.0
        %1328 = vmatpush1.msra.mxu0 0.0
        %1329 = vmatprep.subr.mxu0 0.0
        %1330 = vmatpush1.msra.mxu0 0.0
        %1331 = vmatprep.subr.mxu0 0.0
        %1332 = vmatpush1.msra.mxu0 0.0
        %1333 = vmatprep.subr.mxu0 0.0
        %1334 = vmatpush1.msra.mxu0 0.0
        %1335 = vmatprep.subr.mxu0 0.0
        %1336 = vmatpush1.msra.mxu0 0.0
        %1337 = vmatprep.subr.mxu0 0.0
        %1338 = vmatpush1.msra.mxu0 0.0
        %1339 = vmatprep.subr.mxu0 0.0
        %1340 = vmatpush1.msra.mxu0 0.0
        %1341 = vmatprep.subr.mxu0 0.0
        %1342 = vmatpush1.msra.mxu0 0.0
        %1343 = vmatprep.mubr.f32.mxu0 0.0
        %v1344 = vand.u32 %v540, 4294901760
        %1345 = vmatmul.mubr.f32.gmra.mrb[0].mxu0 %v1344
        %v1346 = vpop.f32.mrb[0].mxu0
        %v1347 = vadd.f32 %v1227, %v1346
        %v1348 = vpop.f32.mrb[0].mxu0
        %1349 = vmatprep.mubr.f32.mxu0 0.0
        %v1350 = vand.u32 %v543, 4294901760
        %1351 = vmatmul.mubr.f32.gmra.mrb[0].mxu0 %v1350
        %v1352 = vpop.f32.mrb[0].mxu0
        %v1353 = vadd.f32 %v1233, %v1352
        %v1354 = vpop.f32.mrb[0].mxu0
        %1355 = vmatprep.mubr.f32.mxu0 0.0
        %v1356 = vand.u32 %v546, 4294901760
        %1357 = vmatmul.mubr.f32.gmra.mrb[0].mxu0 %v1356
        %v1358 = vpop.f32.mrb[0].mxu0
        %v1359 = vadd.f32 %v1239, %v1358
        %v1360 = vpop.f32.mrb[0].mxu0
        %1361 = vmatprep.mubr.f32.mxu0 0.0
        %v1362 = vand.u32 %v549, 4294901760
        %1363 = vmatmul.mubr.f32.gmra.mrb[0].mxu0 %v1362
        %v1364 = vpop.f32.mrb[0].mxu0
        %v1365 = vadd.f32 %v1245, %v1364
        %v1366 = vpop.f32.mrb[0].mxu0
        %1367 = vmatprep.mubr.f32.mxu0 0.0
        %v1368 = vand.u32 %v552, 4294901760
        %1369 = vmatmul.mubr.f32.gmra.mrb[0].mxu0 %v1368
        %v1370 = vpop.f32.mrb[0].mxu0
        %v1371 = vadd.f32 %v1251, %v1370
        %v1372 = vpop.f32.mrb[0].mxu0
        %1373 = vmatprep.mubr.f32.mxu0 0.0
        %v1374 = vand.u32 %v555, 4294901760
        %1375 = vmatmul.mubr.f32.gmra.mrb[0].mxu0 %v1374
        %v1376 = vpop.f32.mrb[0].mxu0
        %v1377 = vadd.f32 %v1257, %v1376
        %v1378 = vpop.f32.mrb[0].mxu0
        %1379 = vmatprep.mubr.f32.mxu0 0.0
        %v1380 = vand.u32 %v558, 4294901760
        %1381 = vmatmul.mubr.f32.gmra.mrb[0].mxu0 %v1380
        %v1382 = vpop.f32.mrb[0].mxu0
        %v1383 = vadd.f32 %v1263, %v1382
        %v1384 = vpop.f32.mrb[0].mxu0
        %1385 = vmatprep.mubr.f32.mxu0 0.0
        %v1386 = vand.u32 %v561, 4294901760
        %1387 = vmatmul.mubr.f32.gmra.mrb[0].mxu0 %v1386
        %v1388 = vpop.f32.mrb[0].mxu0
        %v1389 = vadd.f32 %v1269, %v1388
        %v1390 = vpop.f32.mrb[0].mxu0
        %1391 = vdwg.mxu0
        %vm1392 = vcmask 261120
        %1393 = vst.msk [vmem:[%s438] sm:$0xff] %vm1392, %v1347
        %1394 = vst.msk [vmem:[%s438 + $0x8] sm:$0xff] %vm1392, %v1353
        %1395 = vst.msk [vmem:[%s438 + $0x10] sm:$0xff] %vm1392, %v1359
        %1396 = vst.msk [vmem:[%s438 + $0x18] sm:$0xff] %vm1392, %v1365
        %1397 = vst.msk [vmem:[%s438 + $0x20] sm:$0xff] %vm1392, %v1371
        %1398 = vst.msk [vmem:[%s438 + $0x28] sm:$0xff] %vm1392, %v1377
        %1399 = vst.msk [vmem:[%s438 + $0x30] sm:$0xff] %vm1392, %v1383
        %1400 = vst.msk [vmem:[%s438 + $0x38] sm:$0xff] %vm1392, %v1389
        %v1401 = vsel %vm1392, %v1347, 0.0
        %v1402 = vrot.slane %v1401, 4
        %v1403 = vadd.f32 %v1401, %v1402
        %v1404 = vrot.slane %v1403, 2
        %v1405 = vadd.f32 %v1403, %v1404
        %v1406 = vrot.slane %v1405, 1
        %v1407 = vadd.f32 %v1405, %v1406
        %v1408 = vsel %vm1392, %v1353, 0.0
        %v1409 = vrot.slane %v1408, 4
        %v1410 = vadd.f32 %v1408, %v1409
        %v1411 = vrot.slane %v1410, 2
        %v1412 = vadd.f32 %v1410, %v1411
        %v1413 = vrot.slane %v1412, 1
        %v1414 = vadd.f32 %v1412, %v1413
        %v1415 = vsel %vm1392, %v1359, 0.0
        %v1416 = vrot.slane %v1415, 4
        %v1417 = vadd.f32 %v1415, %v1416
        %v1418 = vrot.slane %v1417, 2
        %v1419 = vadd.f32 %v1417, %v1418
        %v1420 = vrot.slane %v1419, 1
        %v1421 = vadd.f32 %v1419, %v1420
        %v1422 = vsel %vm1392, %v1365, 0.0
        %v1423 = vrot.slane %v1422, 4
        %v1424 = vadd.f32 %v1422, %v1423
        %v1425 = vrot.slane %v1424, 2
        %v1426 = vadd.f32 %v1424, %v1425
        %v1427 = vrot.slane %v1426, 1
        %v1428 = vadd.f32 %v1426, %v1427
        %v1429 = vsel %vm1392, %v1371, 0.0
        %v1430 = vrot.slane %v1429, 4
        %v1431 = vadd.f32 %v1429, %v1430
        %v1432 = vrot.slane %v1431, 2
        %v1433 = vadd.f32 %v1431, %v1432
        %v1434 = vrot.slane %v1433, 1
        %v1435 = vadd.f32 %v1433, %v1434
        %v1436 = vsel %vm1392, %v1377, 0.0
        %v1437 = vrot.slane %v1436, 4
        %v1438 = vadd.f32 %v1436, %v1437
        %v1439 = vrot.slane %v1438, 2
        %v1440 = vadd.f32 %v1438, %v1439
        %v1441 = vrot.slane %v1440, 1
        %v1442 = vadd.f32 %v1440, %v1441
        %v1443 = vsel %vm1392, %v1383, 0.0
        %v1444 = vrot.slane %v1443, 4
        %v1445 = vadd.f32 %v1443, %v1444
        %v1446 = vrot.slane %v1445, 2
        %v1447 = vadd.f32 %v1445, %v1446
        %v1448 = vrot.slane %v1447, 1
        %v1449 = vadd.f32 %v1447, %v1448
        %v1450 = vsel %vm1392, %v1389, 0.0
        %v1451 = vrot.slane %v1450, 4
        %v1452 = vadd.f32 %v1450, %v1451
        %v1453 = vrot.slane %v1452, 2
        %v1454 = vadd.f32 %v1452, %v1453
        %v1455 = vrot.slane %v1454, 1
        %v1456 = vadd.f32 %v1454, %v1455
        %v1457 = vrcp.pop 8.0
        %v1458 = vmul.f32 %v1407, %v1457
        %v1459 = vmul.f32 %v1414, %v1457
        %v1460 = vmul.f32 %v1421, %v1457
        %v1461 = vmul.f32 %v1428, %v1457
        %v1462 = vmul.f32 %v1435, %v1457
        %v1463 = vmul.f32 %v1442, %v1457
        %v1464 = vmul.f32 %v1449, %v1457
        %v1465 = vmul.f32 %v1456, %v1457
        %vm1474 = vcmask 1041409
        %v1475 = vsel %vm1474, %v1459, %v1458
        %vm1476 = vcmask 1042434
        %v1477 = vsel %vm1476, %v1460, %v1475
        %vm1478 = vcmask 1043459
        %v1479 = vsel %vm1478, %v1461, %v1477
        %vm1480 = vcmask 1044484
        %v1481 = vsel %vm1480, %v1462, %v1479
        %vm1482 = vcmask 1045509
        %v1483 = vsel %vm1482, %v1463, %v1481
        %vm1484 = vcmask 1046534
        %v1485 = vsel %vm1484, %v1464, %v1483
        %vm1486 = vcmask 1047559
        %v1487 = vsel %vm1486, %v1465, %v1485
        %1489 = vst.msk [vmem:[%s431] sm:$0xff] %vm1392, %v1487
        %v1490 = vld [vmem:[%s2] sm:$0x1]
        %v1492 = vlaneseq
        %v1493 = vshrl.u32 %v1492, 7
        %v1494 = vsub.s32 0, %v1493
        %v1495 = vrot.slane %v1490, %v1494
        %v1497 = vmul.f32 %v1458, %v1495
        %v1498 = vmul.f32 %v1459, %v1495
        %v1499 = vmul.f32 %v1460, %v1495
        %v1500 = vmul.f32 %v1461, %v1495
        %v1501 = vmul.f32 %v1462, %v1495
        %v1502 = vmul.f32 %v1463, %v1495
        %v1503 = vmul.f32 %v1464, %v1495
        %v1504 = vmul.f32 %v1465, %v1495
        %v1505 = vld [vmem:[%s3] sm:$0x1]
        %v1507 = vlaneseq
        %v1508 = vshrl.u32 %v1507, 7
        %v1509 = vsub.s32 0, %v1508
        %v1510 = vrot.slane %v1505, %v1509
        %v1512 = vadd.f32 %v1497, %v1510
        %v1513 = vadd.f32 %v1498, %v1510
        %v1514 = vadd.f32 %v1499, %v1510
        %v1515 = vadd.f32 %v1500, %v1510
        %v1516 = vadd.f32 %v1501, %v1510
        %v1517 = vadd.f32 %v1502, %v1510
        %v1518 = vadd.f32 %v1503, %v1510
        %v1519 = vadd.f32 %v1504, %v1510
        %v1528 = vrot.slane %v1513, 7
        %v1529 = vsel %vm1474, %v1528, %v1512
        %v1530 = vrot.slane %v1514, 6
        %v1531 = vsel %vm1476, %v1530, %v1529
        %v1532 = vrot.slane %v1515, 5
        %v1533 = vsel %vm1478, %v1532, %v1531
        %v1534 = vrot.slane %v1516, 4
        %v1535 = vsel %vm1480, %v1534, %v1533
        %v1536 = vrot.slane %v1517, 3
        %v1537 = vsel %vm1482, %v1536, %v1535
        %v1538 = vrot.slane %v1518, 2
        %v1539 = vsel %vm1484, %v1538, %v1537
        %v1540 = vrot.slane %v1519, 1
        %v1541 = vsel %vm1486, %v1540, %v1539
        %1543 = vst.msk [vmem:[%s424] sm:$0xff] %vm1392, %v1541
        %v1544 = vld [vmem:[%s4] sm:$0xff]
        %v1545 = vld [vmem:[%s4 + $0x8] sm:$0xff]
        %v1546 = vld [vmem:[%s4 + $0x10] sm:$0xff]
        %v1547 = vld [vmem:[%s4 + $0x18] sm:$0xff]
        %v1548 = vld [vmem:[%s5] sm:$0x1]
        %v1550 = vlaneseq
        %v1551 = vshrl.u32 %v1550, 7
        %v1552 = vsub.s32 0, %v1551
        %v1553 = vrot.slane %v1548, %v1552
        %v1555 = vsel %vm1392, %v1541, 0
        %1557 = vmatprep.subr.mxu0 0.0
        %v1558 = vand.u32 %v1544, 4294901760
        %1559 = vmatpush1.msra.mxu0 %v1558
        %1560 = vmatprep.subr.mxu0 0.0
        %v1561 = vand.u32 %v1545, 4294901760
        %1562 = vmatpush1.msra.mxu0 %v1561
        %1563 = vmatprep.subr.mxu0 0.0
        %v1564 = vand.u32 %v1546, 4294901760
        %1565 = vmatpush1.msra.mxu0 %v1564
        %1566 = vmatprep.subr.mxu0 0.0
        %v1567 = vand.u32 %v1547, 4294901760
        %1568 = vmatpush1.msra.mxu0 %v1567
        %1569 = vmatprep.subr.mxu0 0.0
        %1570 = vmatpush1.msra.mxu0 0.0
        %1571 = vmatprep.subr.mxu0 0.0
        %1572 = vmatpush1.msra.mxu0 0.0
        %1573 = vmatprep.subr.mxu0 0.0
        %1574 = vmatpush1.msra.mxu0 0.0
        %1575 = vmatprep.subr.mxu0 0.0
        %1576 = vmatpush1.msra.mxu0 0.0
        %1577 = vmatprep.subr.mxu0 0.0
        %1578 = vmatpush1.msra.mxu0 0.0
        %1579 = vmatprep.subr.mxu0 0.0
        %1580 = vmatpush1.msra.mxu0 0.0
        %1581 = vmatprep.subr.mxu0 0.0
        %1582 = vmatpush1.msra.mxu0 0.0
        %1583 = vmatprep.subr.mxu0 0.0
        %1584 = vmatpush1.msra.mxu0 0.0
        %1585 = vmatprep.subr.mxu0 0.0
        %1586 = vmatpush1.msra.mxu0 0.0
        %1587 = vmatprep.subr.mxu0 0.0
        %1588 = vmatpush1.msra.mxu0 0.0
        %1589 = vmatprep.subr.mxu0 0.0
        %1590 = vmatpush1.msra.mxu0 0.0
        %1591 = vmatprep.subr.mxu0 0.0
        %1592 = vmatpush1.msra.mxu0 0.0
        %1593 = vmatprep.subr.mxu0 0.0
        %1594 = vmatpush1.msra.mxu0 0.0
        %1595 = vmatprep.subr.mxu0 0.0
        %1596 = vmatpush1.msra.mxu0 0.0
        %1597 = vmatprep.subr.mxu0 0.0
        %1598 = vmatpush1.msra.mxu0 0.0
        %1599 = vmatprep.subr.mxu0 0.0
        %1600 = vmatpush1.msra.mxu0 0.0
        %1601 = vmatprep.subr.mxu0 0.0
        %1602 = vmatpush1.msra.mxu0 0.0
        %1603 = vmatprep.subr.mxu0 0.0
        %1604 = vmatpush1.msra.mxu0 0.0
        %1605 = vmatprep.subr.mxu0 0.0
        %1606 = vmatpush1.msra.mxu0 0.0
        %1607 = vmatprep.subr.mxu0 0.0
        %1608 = vmatpush1.msra.mxu0 0.0
        %1609 = vmatprep.subr.mxu0 0.0
        %1610 = vmatpush1.msra.mxu0 0.0
        %1611 = vmatprep.subr.mxu0 0.0
        %1612 = vmatpush1.msra.mxu0 0.0
        %1613 = vmatprep.subr.mxu0 0.0
        %1614 = vmatpush1.msra.mxu0 0.0
        %1615 = vmatprep.subr.mxu0 0.0
        %1616 = vmatpush1.msra.mxu0 0.0
        %1617 = vmatprep.subr.mxu0 0.0
        %1618 = vmatpush1.msra.mxu0 0.0
        %1619 = vmatprep.subr.mxu0 0.0
        %1620 = vmatpush1.msra.mxu0 0.0
        %1621 = vmatprep.subr.mxu0 0.0
        %1622 = vmatpush1.msra.mxu0 0.0
        %1623 = vmatprep.subr.mxu0 0.0
        %1624 = vmatpush1.msra.mxu0 0.0
        %1625 = vmatprep.mubr.f32.mxu0 0.0
        %v1626 = vand.u32 %v1555, 4294901760
        %v1627 = vsub.f32 %v1555, %v1626
        %v1628 = vand.u32 %v1627, 4294901760
        %v1629 = vsub.f32 %v1627, %v1628
        %v1630 = vand.u32 %v1629, 4294901760
        %1631 = vmatmul.mubr.f32.gmra.mrb[0].mxu0 %v1630
        %v1632 = vpop.f32.mrb[0].mxu0
        %v1633 = vadd.f32 %v1553, %v1632
        %v1634 = vpop.f32.mrb[0].mxu0
        %1635 = vdwg.mxu0
        %1636 = vmatprep.subr.mxu0 0.0
        %v1637 = vand.u32 %v1544, 4294901760
        %v1638 = vsub.f32 %v1544, %v1637
        %v1639 = vand.u32 %v1638, 4294901760
        %v1640 = vsub.f32 %v1638, %v1639
        %v1641 = vand.u32 %v1640, 4294901760
        %1642 = vmatpush1.msra.mxu0 %v1641
        %1643 = vmatprep.subr.mxu0 0.0
        %v1644 = vand.u32 %v1545, 4294901760
        %v1645 = vsub.f32 %v1545, %v1644
        %v1646 = vand.u32 %v1645, 4294901760
        %v1647 = vsub.f32 %v1645, %v1646
        %v1648 = vand.u32 %v1647, 4294901760
        %1649 = vmatpush1.msra.mxu0 %v1648
        %1650 = vmatprep.subr.mxu0 0.0
        %v1651 = vand.u32 %v1546, 4294901760
        %v1652 = vsub.f32 %v1546, %v1651
        %v1653 = vand.u32 %v1652, 4294901760
        %v1654 = vsub.f32 %v1652, %v1653
        %v1655 = vand.u32 %v1654, 4294901760
        %1656 = vmatpush1.msra.mxu0 %v1655
        %1657 = vmatprep.subr.mxu0 0.0
        %v1658 = vand.u32 %v1547, 4294901760
        %v1659 = vsub.f32 %v1547, %v1658
        %v1660 = vand.u32 %v1659, 4294901760
        %v1661 = vsub.f32 %v1659, %v1660
        %v1662 = vand.u32 %v1661, 4294901760
        %1663 = vmatpush1.msra.mxu0 %v1662
        %1664 = vmatprep.subr.mxu0 0.0
        %1665 = vmatpush1.msra.mxu0 0.0
        %1666 = vmatprep.subr.mxu0 0.0
        %1667 = vmatpush1.msra.mxu0 0.0
        %1668 = vmatprep.subr.mxu0 0.0
        %1669 = vmatpush1.msra.mxu0 0.0
        %1670 = vmatprep.subr.mxu0 0.0
        %1671 = vmatpush1.msra.mxu0 0.0
        %1672 = vmatprep.subr.mxu0 0.0
        %1673 = vmatpush1.msra.mxu0 0.0
        %1674 = vmatprep.subr.mxu0 0.0
        %1675 = vmatpush1.msra.mxu0 0.0
        %1676 = vmatprep.subr.mxu0 0.0
        %1677 = vmatpush1.msra.mxu0 0.0
        %1678 = vmatprep.subr.mxu0 0.0
        %1679 = vmatpush1.msra.mxu0 0.0
        %1680 = vmatprep.subr.mxu0 0.0
        %1681 = vmatpush1.msra.mxu0 0.0
        %1682 = vmatprep.subr.mxu0 0.0
        %1683 = vmatpush1.msra.mxu0 0.0
        %1684 = vmatprep.subr.mxu0 0.0
        %1685 = vmatpush1.msra.mxu0 0.0
        %1686 = vmatprep.subr.mxu0 0.0
        %1687 = vmatpush1.msra.mxu0 0.0
        %1688 = vmatprep.subr.mxu0 0.0
        %1689 = vmatpush1.msra.mxu0 0.0
        %1690 = vmatprep.subr.mxu0 0.0
        %1691 = vmatpush1.msra.mxu0 0.0
        %1692 = vmatprep.subr.mxu0 0.0
        %1693 = vmatpush1.msra.mxu0 0.0
        %1694 = vmatprep.subr.mxu0 0.0
        %1695 = vmatpush1.msra.mxu0 0.0
        %1696 = vmatprep.subr.mxu0 0.0
        %1697 = vmatpush1.msra.mxu0 0.0
        %1698 = vmatprep.subr.mxu0 0.0
        %1699 = vmatpush1.msra.mxu0 0.0
        %1700 = vmatprep.subr.mxu0 0.0
        %1701 = vmatpush1.msra.mxu0 0.0
        %1702 = vmatprep.subr.mxu0 0.0
        %1703 = vmatpush1.msra.mxu0 0.0
        %1704 = vmatprep.subr.mxu0 0.0
        %1705 = vmatpush1.msra.mxu0 0.0
        %1706 = vmatprep.subr.mxu0 0.0
        %1707 = vmatpush1.msra.mxu0 0.0
        %1708 = vmatprep.subr.mxu0 0.0
        %1709 = vmatpush1.msra.mxu0 0.0
        %1710 = vmatprep.subr.mxu0 0.0
        %1711 = vmatpush1.msra.mxu0 0.0
        %1712 = vmatprep.subr.mxu0 0.0
        %1713 = vmatpush1.msra.mxu0 0.0
        %1714 = vmatprep.subr.mxu0 0.0
        %1715 = vmatpush1.msra.mxu0 0.0
        %1716 = vmatprep.subr.mxu0 0.0
        %1717 = vmatpush1.msra.mxu0 0.0
        %1718 = vmatprep.subr.mxu0 0.0
        %1719 = vmatpush1.msra.mxu0 0.0
        %1720 = vmatprep.mubr.f32.mxu0 0.0
        %v1721 = vand.u32 %v1555, 4294901760
        %1722 = vmatmul.mubr.f32.gmra.mrb[0].mxu0 %v1721
        %v1723 = vpop.f32.mrb[0].mxu0
        %v1724 = vadd.f32 %v1633, %v1723
        %v1725 = vpop.f32.mrb[0].mxu0
        %1726 = vdwg.mxu0
        %1727 = vmatprep.subr.mxu0 0.0
        %v1728 = vand.u32 %v1544, 4294901760
        %v1729 = vsub.f32 %v1544, %v1728
        %1730 = vmatpush1.msra.mxu0 %v1729
        %1731 = vmatprep.subr.mxu0 0.0
        %v1732 = vand.u32 %v1545, 4294901760
        %v1733 = vsub.f32 %v1545, %v1732
        %1734 = vmatpush1.msra.mxu0 %v1733
        %1735 = vmatprep.subr.mxu0 0.0
        %v1736 = vand.u32 %v1546, 4294901760
        %v1737 = vsub.f32 %v1546, %v1736
        %1738 = vmatpush1.msra.mxu0 %v1737
        %1739 = vmatprep.subr.mxu0 0.0
        %v1740 = vand.u32 %v1547, 4294901760
        %v1741 = vsub.f32 %v1547, %v1740
        %1742 = vmatpush1.msra.mxu0 %v1741
        %1743 = vmatprep.subr.mxu0 0.0
        %1744 = vmatpush1.msra.mxu0 0.0
        %1745 = vmatprep.subr.mxu0 0.0
        %1746 = vmatpush1.msra.mxu0 0.0
        %1747 = vmatprep.subr.mxu0 0.0
        %1748 = vmatpush1.msra.mxu0 0.0
        %1749 = vmatprep.subr.mxu0 0.0
        %1750 = vmatpush1.msra.mxu0 0.0
        %1751 = vmatprep.subr.mxu0 0.0
        %1752 = vmatpush1.msra.mxu0 0.0
        %1753 = vmatprep.subr.mxu0 0.0
        %1754 = vmatpush1.msra.mxu0 0.0
        %1755 = vmatprep.subr.mxu0 0.0
        %1756 = vmatpush1.msra.mxu0 0.0
        %1757 = vmatprep.subr.mxu0 0.0
        %1758 = vmatpush1.msra.mxu0 0.0
        %1759 = vmatprep.subr.mxu0 0.0
        %1760 = vmatpush1.msra.mxu0 0.0
        %1761 = vmatprep.subr.mxu0 0.0
        %1762 = vmatpush1.msra.mxu0 0.0
        %1763 = vmatprep.subr.mxu0 0.0
        %1764 = vmatpush1.msra.mxu0 0.0
        %1765 = vmatprep.subr.mxu0 0.0
        %1766 = vmatpush1.msra.mxu0 0.0
        %1767 = vmatprep.subr.mxu0 0.0
        %1768 = vmatpush1.msra.mxu0 0.0
        %1769 = vmatprep.subr.mxu0 0.0
        %1770 = vmatpush1.msra.mxu0 0.0
        %1771 = vmatprep.subr.mxu0 0.0
        %1772 = vmatpush1.msra.mxu0 0.0
        %1773 = vmatprep.subr.mxu0 0.0
        %1774 = vmatpush1.msra.mxu0 0.0
        %1775 = vmatprep.subr.mxu0 0.0
        %1776 = vmatpush1.msra.mxu0 0.0
        %1777 = vmatprep.subr.mxu0 0.0
        %1778 = vmatpush1.msra.mxu0 0.0
        %1779 = vmatprep.subr.mxu0 0.0
        %1780 = vmatpush1.msra.mxu0 0.0
        %1781 = vmatprep.subr.mxu0 0.0
        %1782 = vmatpush1.msra.mxu0 0.0
        %1783 = vmatprep.subr.mxu0 0.0
        %1784 = vmatpush1.msra.mxu0 0.0
        %1785 = vmatprep.subr.mxu0 0.0
        %1786 = vmatpush1.msra.mxu0 0.0
        %1787 = vmatprep.subr.mxu0 0.0
        %1788 = vmatpush1.msra.mxu0 0.0
        %1789 = vmatprep.subr.mxu0 0.0
        %1790 = vmatpush1.msra.mxu0 0.0
        %1791 = vmatprep.subr.mxu0 0.0
        %1792 = vmatpush1.msra.mxu0 0.0
        %1793 = vmatprep.subr.mxu0 0.0
        %1794 = vmatpush1.msra.mxu0 0.0
        %1795 = vmatprep.subr.mxu0 0.0
        %1796 = vmatpush1.msra.mxu0 0.0
        %1797 = vmatprep.subr.mxu0 0.0
        %1798 = vmatpush1.msra.mxu0 0.0
        %1799 = vmatprep.mubr.f32.mxu0 0.0
        %v1800 = vand.u32 %v1555, 4294901760
        %v1801 = vsub.f32 %v1555, %v1800
        %1802 = vmatmul.mubr.f32.gmra.mrb[0].mxu0 %v1801
        %v1803 = vpop.f32.mrb[0].mxu0
        %v1804 = vadd.f32 %v1724, %v1803
        %v1805 = vpop.f32.mrb[0].mxu0
        %1806 = vdwg.mxu0
        %1807 = vmatprep.subr.mxu0 0.0
        %v1808 = vand.u32 %v1544, 4294901760
        %1809 = vmatpush1.msra.mxu0 %v1808
        %1810 = vmatprep.subr.mxu0 0.0
        %v1811 = vand.u32 %v1545, 4294901760
        %1812 = vmatpush1.msra.mxu0 %v1811
        %1813 = vmatprep.subr.mxu0 0.0
        %v1814 = vand.u32 %v1546, 4294901760
        %1815 = vmatpush1.msra.mxu0 %v1814
        %1816 = vmatprep.subr.mxu0 0.0
        %v1817 = vand.u32 %v1547, 4294901760
        %1818 = vmatpush1.msra.mxu0 %v1817
        %1819 = vmatprep.subr.mxu0 0.0
        %1820 = vmatpush1.msra.mxu0 0.0
        %1821 = vmatprep.subr.mxu0 0.0
        %1822 = vmatpush1.msra.mxu0 0.0
        %1823 = vmatprep.subr.mxu0 0.0
        %1824 = vmatpush1.msra.mxu0 0.0
        %1825 = vmatprep.subr.mxu0 0.0
        %1826 = vmatpush1.msra.mxu0 0.0
        %1827 = vmatprep.subr.mxu0 0.0
        %1828 = vmatpush1.msra.mxu0 0.0
        %1829 = vmatprep.subr.mxu0 0.0
        %1830 = vmatpush1.msra.mxu0 0.0
        %1831 = vmatprep.subr.mxu0 0.0
        %1832 = vmatpush1.msra.mxu0 0.0
        %1833 = vmatprep.subr.mxu0 0.0
        %1834 = vmatpush1.msra.mxu0 0.0
        %1835 = vmatprep.subr.mxu0 0.0
        %1836 = vmatpush1.msra.mxu0 0.0
        %1837 = vmatprep.subr.mxu0 0.0
        %1838 = vmatpush1.msra.mxu0 0.0
        %1839 = vmatprep.subr.mxu0 0.0
        %1840 = vmatpush1.msra.mxu0 0.0
        %1841 = vmatprep.subr.mxu0 0.0
        %1842 = vmatpush1.msra.mxu0 0.0
        %1843 = vmatprep.subr.mxu0 0.0
        %1844 = vmatpush1.msra.mxu0 0.0
        %1845 = vmatprep.subr.mxu0 0.0
        %1846 = vmatpush1.msra.mxu0 0.0
        %1847 = vmatprep.subr.mxu0 0.0
        %1848 = vmatpush1.msra.mxu0 0.0
        %1849 = vmatprep.subr.mxu0 0.0
        %1850 = vmatpush1.msra.mxu0 0.0
        %1851 = vmatprep.subr.mxu0 0.0
        %1852 = vmatpush1.msra.mxu0 0.0
        %1853 = vmatprep.subr.mxu0 0.0
        %1854 = vmatpush1.msra.mxu0 0.0
        %1855 = vmatprep.subr.mxu0 0.0
        %1856 = vmatpush1.msra.mxu0 0.0
        %1857 = vmatprep.subr.mxu0 0.0
        %1858 = vmatpush1.msra.mxu0 0.0
        %1859 = vmatprep.subr.mxu0 0.0
        %1860 = vmatpush1.msra.mxu0 0.0
        %1861 = vmatprep.subr.mxu0 0.0
        %1862 = vmatpush1.msra.mxu0 0.0
        %1863 = vmatprep.subr.mxu0 0.0
        %1864 = vmatpush1.msra.mxu0 0.0
        %1865 = vmatprep.subr.mxu0 0.0
        %1866 = vmatpush1.msra.mxu0 0.0
        %1867 = vmatprep.subr.mxu0 0.0
        %1868 = vmatpush1.msra.mxu0 0.0
        %1869 = vmatprep.subr.mxu0 0.0
        %1870 = vmatpush1.msra.mxu0 0.0
        %1871 = vmatprep.subr.mxu0 0.0
        %1872 = vmatpush1.msra.mxu0 0.0
        %1873 = vmatprep.subr.mxu0 0.0
        %1874 = vmatpush1.msra.mxu0 0.0
        %1875 = vmatprep.mubr.f32.mxu0 0.0
        %v1876 = vand.u32 %v1555, 4294901760
        %v1877 = vsub.f32 %v1555, %v1876
        %v1878 = vand.u32 %v1877, 4294901760
        %1879 = vmatmul.mubr.f32.gmra.mrb[0].mxu0 %v1878
        %v1880 = vpop.f32.mrb[0].mxu0
        %v1881 = vadd.f32 %v1804, %v1880
        %v1882 = vpop.f32.mrb[0].mxu0
        %1883 = vdwg.mxu0
        %1884 = vmatprep.subr.mxu0 0.0
        %v1885 = vand.u32 %v1544, 4294901760
        %v1886 = vsub.f32 %v1544, %v1885
        %v1887 = vand.u32 %v1886, 4294901760
        %1888 = vmatpush1.msra.mxu0 %v1887
        %1889 = vmatprep.subr.mxu0 0.0
        %v1890 = vand.u32 %v1545, 4294901760
        %v1891 = vsub.f32 %v1545, %v1890
        %v1892 = vand.u32 %v1891, 4294901760
        %1893 = vmatpush1.msra.mxu0 %v1892
        %1894 = vmatprep.subr.mxu0 0.0
        %v1895 = vand.u32 %v1546, 4294901760
        %v1896 = vsub.f32 %v1546, %v1895
        %v1897 = vand.u32 %v1896, 4294901760
        %1898 = vmatpush1.msra.mxu0 %v1897
        %1899 = vmatprep.subr.mxu0 0.0
        %v1900 = vand.u32 %v1547, 4294901760
        %v1901 = vsub.f32 %v1547, %v1900
        %v1902 = vand.u32 %v1901, 4294901760
        %1903 = vmatpush1.msra.mxu0 %v1902
        %1904 = vmatprep.subr.mxu0 0.0
        %1905 = vmatpush1.msra.mxu0 0.0
        %1906 = vmatprep.subr.mxu0 0.0
        %1907 = vmatpush1.msra.mxu0 0.0
        %1908 = vmatprep.subr.mxu0 0.0
        %1909 = vmatpush1.msra.mxu0 0.0
        %1910 = vmatprep.subr.mxu0 0.0
        %1911 = vmatpush1.msra.mxu0 0.0
        %1912 = vmatprep.subr.mxu0 0.0
        %1913 = vmatpush1.msra.mxu0 0.0
        %1914 = vmatprep.subr.mxu0 0.0
        %1915 = vmatpush1.msra.mxu0 0.0
        %1916 = vmatprep.subr.mxu0 0.0
        %1917 = vmatpush1.msra.mxu0 0.0
        %1918 = vmatprep.subr.mxu0 0.0
        %1919 = vmatpush1.msra.mxu0 0.0
        %1920 = vmatprep.subr.mxu0 0.0
        %1921 = vmatpush1.msra.mxu0 0.0
        %1922 = vmatprep.subr.mxu0 0.0
        %1923 = vmatpush1.msra.mxu0 0.0
        %1924 = vmatprep.subr.mxu0 0.0
        %1925 = vmatpush1.msra.mxu0 0.0
        %1926 = vmatprep.subr.mxu0 0.0
        %1927 = vmatpush1.msra.mxu0 0.0
        %1928 = vmatprep.subr.mxu0 0.0
        %1929 = vmatpush1.msra.mxu0 0.0
        %1930 = vmatprep.subr.mxu0 0.0
        %1931 = vmatpush1.msra.mxu0 0.0
        %1932 = vmatprep.subr.mxu0 0.0
        %1933 = vmatpush1.msra.mxu0 0.0
        %1934 = vmatprep.subr.mxu0 0.0
        %1935 = vmatpush1.msra.mxu0 0.0
        %1936 = vmatprep.subr.mxu0 0.0
        %1937 = vmatpush1.msra.mxu0 0.0
        %1938 = vmatprep.subr.mxu0 0.0
        %1939 = vmatpush1.msra.mxu0 0.0
        %1940 = vmatprep.subr.mxu0 0.0
        %1941 = vmatpush1.msra.mxu0 0.0
        %1942 = vmatprep.subr.mxu0 0.0
        %1943 = vmatpush1.msra.mxu0 0.0
        %1944 = vmatprep.subr.mxu0 0.0
        %1945 = vmatpush1.msra.mxu0 0.0
        %1946 = vmatprep.subr.mxu0 0.0
        %1947 = vmatpush1.msra.mxu0 0.0
        %1948 = vmatprep.subr.mxu0 0.0
        %1949 = vmatpush1.msra.mxu0 0.0
        %1950 = vmatprep.subr.mxu0 0.0
        %1951 = vmatpush1.msra.mxu0 0.0
        %1952 = vmatprep.subr.mxu0 0.0
        %1953 = vmatpush1.msra.mxu0 0.0
        %1954 = vmatprep.subr.mxu0 0.0
        %1955 = vmatpush1.msra.mxu0 0.0
        %1956 = vmatprep.subr.mxu0 0.0
        %1957 = vmatpush1.msra.mxu0 0.0
        %1958 = vmatprep.subr.mxu0 0.0
        %1959 = vmatpush1.msra.mxu0 0.0
        %1960 = vmatprep.mubr.f32.mxu0 0.0
        %v1961 = vand.u32 %v1555, 4294901760
        %1962 = vmatmul.mubr.f32.gmra.mrb[0].mxu0 %v1961
        %v1963 = vpop.f32.mrb[0].mxu0
        %v1964 = vadd.f32 %v1881, %v1963
        %v1965 = vpop.f32.mrb[0].mxu0
        %1966 = vdwg.mxu0
        %1967 = vmatprep.subr.mxu0 0.0
        %v1968 = vand.u32 %v1544, 4294901760
        %1969 = vmatpush1.msra.mxu0 %v1968
        %1970 = vmatprep.subr.mxu0 0.0
        %v1971 = vand.u32 %v1545, 4294901760
        %1972 = vmatpush1.msra.mxu0 %v1971
        %1973 = vmatprep.subr.mxu0 0.0
        %v1974 = vand.u32 %v1546, 4294901760
        %1975 = vmatpush1.msra.mxu0 %v1974
        %1976 = vmatprep.subr.mxu0 0.0
        %v1977 = vand.u32 %v1547, 4294901760
        %1978 = vmatpush1.msra.mxu0 %v1977
        %1979 = vmatprep.subr.mxu0 0.0
        %1980 = vmatpush1.msra.mxu0 0.0
        %1981 = vmatprep.subr.mxu0 0.0
        %1982 = vmatpush1.msra.mxu0 0.0
        %1983 = vmatprep.subr.mxu0 0.0
        %1984 = vmatpush1.msra.mxu0 0.0
        %1985 = vmatprep.subr.mxu0 0.0
        %1986 = vmatpush1.msra.mxu0 0.0
        %1987 = vmatprep.subr.mxu0 0.0
        %1988 = vmatpush1.msra.mxu0 0.0
        %1989 = vmatprep.subr.mxu0 0.0
        %1990 = vmatpush1.msra.mxu0 0.0
        %1991 = vmatprep.subr.mxu0 0.0
        %1992 = vmatpush1.msra.mxu0 0.0
        %1993 = vmatprep.subr.mxu0 0.0
        %1994 = vmatpush1.msra.mxu0 0.0
        %1995 = vmatprep.subr.mxu0 0.0
        %1996 = vmatpush1.msra.mxu0 0.0
        %1997 = vmatprep.subr.mxu0 0.0
        %1998 = vmatpush1.msra.mxu0 0.0
        %1999 = vmatprep.subr.mxu0 0.0
        %2000 = vmatpush1.msra.mxu0 0.0
        %2001 = vmatprep.subr.mxu0 0.0
        %2002 = vmatpush1.msra.mxu0 0.0
        %2003 = vmatprep.subr.mxu0 0.0
        %2004 = vmatpush1.msra.mxu0 0.0
        %2005 = vmatprep.subr.mxu0 0.0
        %2006 = vmatpush1.msra.mxu0 0.0
        %2007 = vmatprep.subr.mxu0 0.0
        %2008 = vmatpush1.msra.mxu0 0.0
        %2009 = vmatprep.subr.mxu0 0.0
        %2010 = vmatpush1.msra.mxu0 0.0
        %2011 = vmatprep.subr.mxu0 0.0
        %2012 = vmatpush1.msra.mxu0 0.0
        %2013 = vmatprep.subr.mxu0 0.0
        %2014 = vmatpush1.msra.mxu0 0.0
        %2015 = vmatprep.subr.mxu0 0.0
        %2016 = vmatpush1.msra.mxu0 0.0
        %2017 = vmatprep.subr.mxu0 0.0
        %2018 = vmatpush1.msra.mxu0 0.0
        %2019 = vmatprep.subr.mxu0 0.0
        %2020 = vmatpush1.msra.mxu0 0.0
        %2021 = vmatprep.subr.mxu0 0.0
        %2022 = vmatpush1.msra.mxu0 0.0
        %2023 = vmatprep.subr.mxu0 0.0
        %2024 = vmatpush1.msra.mxu0 0.0
        %2025 = vmatprep.subr.mxu0 0.0
        %2026 = vmatpush1.msra.mxu0 0.0
        %2027 = vmatprep.subr.mxu0 0.0
        %2028 = vmatpush1.msra.mxu0 0.0
        %2029 = vmatprep.subr.mxu0 0.0
        %2030 = vmatpush1.msra.mxu0 0.0
        %2031 = vmatprep.subr.mxu0 0.0
        %2032 = vmatpush1.msra.mxu0 0.0
        %2033 = vmatprep.subr.mxu0 0.0
        %2034 = vmatpush1.msra.mxu0 0.0
        %2035 = vmatprep.mubr.f32.mxu0 0.0
        %v2036 = vand.u32 %v1555, 4294901760
        %2037 = vmatmul.mubr.f32.gmra.mrb[0].mxu0 %v2036
        %v2038 = vpop.f32.mrb[0].mxu0
        %v2039 = vadd.f32 %v1964, %v2038
        %v2040 = vpop.f32.mrb[0].mxu0
        %2041 = vdwg.mxu0
        %2042 = vst.msk [vmem:[%s417] sm:$0xff] %vm1392, %v2039
        %v2043 = vld [vmem:[%s6] sm:$0xff]
        %v2044 = vld [vmem:[%s6 + $0x8] sm:$0xff]
        %v2045 = vld [vmem:[%s6 + $0x10] sm:$0xff]
        %v2046 = vld [vmem:[%s6 + $0x18] sm:$0xff]
        %v2047 = vld [vmem:[%s7] sm:$0x1]
        %v2049 = vlaneseq
        %v2050 = vshrl.u32 %v2049, 7
        %v2051 = vsub.s32 0, %v2050
        %v2052 = vrot.slane %v2047, %v2051
        %v2055 = vsel %vm1392, %v2039, 0
        %2057 = vmatprep.subr.mxu0 0.0
        %v2058 = vand.u32 %v2043, 4294901760
        %2059 = vmatpush1.msra.mxu0 %v2058
        %2060 = vmatprep.subr.mxu0 0.0
        %v2061 = vand.u32 %v2044, 4294901760
        %2062 = vmatpush1.msra.mxu0 %v2061
        %2063 = vmatprep.subr.mxu0 0.0
        %v2064 = vand.u32 %v2045, 4294901760
        %2065 = vmatpush1.msra.mxu0 %v2064
        %2066 = vmatprep.subr.mxu0 0.0
        %v2067 = vand.u32 %v2046, 4294901760
        %2068 = vmatpush1.msra.mxu0 %v2067
        %2069 = vmatprep.subr.mxu0 0.0
        %2070 = vmatpush1.msra.mxu0 0.0
        %2071 = vmatprep.subr.mxu0 0.0
        %2072 = vmatpush1.msra.mxu0 0.0
        %2073 = vmatprep.subr.mxu0 0.0
        %2074 = vmatpush1.msra.mxu0 0.0
        %2075 = vmatprep.subr.mxu0 0.0
        %2076 = vmatpush1.msra.mxu0 0.0
        %2077 = vmatprep.subr.mxu0 0.0
        %2078 = vmatpush1.msra.mxu0 0.0
        %2079 = vmatprep.subr.mxu0 0.0
        %2080 = vmatpush1.msra.mxu0 0.0
        %2081 = vmatprep.subr.mxu0 0.0
        %2082 = vmatpush1.msra.mxu0 0.0
        %2083 = vmatprep.subr.mxu0 0.0
        %2084 = vmatpush1.msra.mxu0 0.0
        %2085 = vmatprep.subr.mxu0 0.0
        %2086 = vmatpush1.msra.mxu0 0.0
        %2087 = vmatprep.subr.mxu0 0.0
        %2088 = vmatpush1.msra.mxu0 0.0
        %2089 = vmatprep.subr.mxu0 0.0
        %2090 = vmatpush1.msra.mxu0 0.0
        %2091 = vmatprep.subr.mxu0 0.0
        %2092 = vmatpush1.msra.mxu0 0.0
        %2093 = vmatprep.subr.mxu0 0.0
        %2094 = vmatpush1.msra.mxu0 0.0
        %2095 = vmatprep.subr.mxu0 0.0
        %2096 = vmatpush1.msra.mxu0 0.0
        %2097 = vmatprep.subr.mxu0 0.0
        %2098 = vmatpush1.msra.mxu0 0.0
        %2099 = vmatprep.subr.mxu0 0.0
        %2100 = vmatpush1.msra.mxu0 0.0
        %2101 = vmatprep.subr.mxu0 0.0
        %2102 = vmatpush1.msra.mxu0 0.0
        %2103 = vmatprep.subr.mxu0 0.0
        %2104 = vmatpush1.msra.mxu0 0.0
        %2105 = vmatprep.subr.mxu0 0.0
        %2106 = vmatpush1.msra.mxu0 0.0
        %2107 = vmatprep.subr.mxu0 0.0
        %2108 = vmatpush1.msra.mxu0 0.0
        %2109 = vmatprep.subr.mxu0 0.0
        %2110 = vmatpush1.msra.mxu0 0.0
        %2111 = vmatprep.subr.mxu0 0.0
        %2112 = vmatpush1.msra.mxu0 0.0
        %2113 = vmatprep.subr.mxu0 0.0
        %2114 = vmatpush1.msra.mxu0 0.0
        %2115 = vmatprep.subr.mxu0 0.0
        %2116 = vmatpush1.msra.mxu0 0.0
        %2117 = vmatprep.subr.mxu0 0.0
        %2118 = vmatpush1.msra.mxu0 0.0
        %2119 = vmatprep.subr.mxu0 0.0
        %2120 = vmatpush1.msra.mxu0 0.0
        %2121 = vmatprep.subr.mxu0 0.0
        %2122 = vmatpush1.msra.mxu0 0.0
        %2123 = vmatprep.subr.mxu0 0.0
        %2124 = vmatpush1.msra.mxu0 0.0
        %2125 = vmatprep.mubr.f32.mxu0 0.0
        %v2126 = vand.u32 %v2055, 4294901760
        %v2127 = vsub.f32 %v2055, %v2126
        %v2128 = vand.u32 %v2127, 4294901760
        %v2129 = vsub.f32 %v2127, %v2128
        %v2130 = vand.u32 %v2129, 4294901760
        %2131 = vmatmul.mubr.f32.gmra.mrb[0].mxu0 %v2130
        %v2132 = vpop.f32.mrb[0].mxu0
        %v2133 = vadd.f32 %v2052, %v2132
        %v2134 = vpop.f32.mrb[0].mxu0
        %2135 = vdwg.mxu0
        %2136 = vmatprep.subr.mxu0 0.0
        %v2137 = vand.u32 %v2043, 4294901760
        %v2138 = vsub.f32 %v2043, %v2137
        %v2139 = vand.u32 %v2138, 4294901760
        %v2140 = vsub.f32 %v2138, %v2139
        %v2141 = vand.u32 %v2140, 4294901760
        %2142 = vmatpush1.msra.mxu0 %v2141
        %2143 = vmatprep.subr.mxu0 0.0
        %v2144 = vand.u32 %v2044, 4294901760
        %v2145 = vsub.f32 %v2044, %v2144
        %v2146 = vand.u32 %v2145, 4294901760
        %v2147 = vsub.f32 %v2145, %v2146
        %v2148 = vand.u32 %v2147, 4294901760
        %2149 = vmatpush1.msra.mxu0 %v2148
        %2150 = vmatprep.subr.mxu0 0.0
        %v2151 = vand.u32 %v2045, 4294901760
        %v2152 = vsub.f32 %v2045, %v2151
        %v2153 = vand.u32 %v2152, 4294901760
        %v2154 = vsub.f32 %v2152, %v2153
        %v2155 = vand.u32 %v2154, 4294901760
        %2156 = vmatpush1.msra.mxu0 %v2155
        %2157 = vmatprep.subr.mxu0 0.0
        %v2158 = vand.u32 %v2046, 4294901760
        %v2159 = vsub.f32 %v2046, %v2158
        %v2160 = vand.u32 %v2159, 4294901760
        %v2161 = vsub.f32 %v2159, %v2160
        %v2162 = vand.u32 %v2161, 4294901760
        %2163 = vmatpush1.msra.mxu0 %v2162
        %2164 = vmatprep.subr.mxu0 0.0
        %2165 = vmatpush1.msra.mxu0 0.0
        %2166 = vmatprep.subr.mxu0 0.0
        %2167 = vmatpush1.msra.mxu0 0.0
        %2168 = vmatprep.subr.mxu0 0.0
        %2169 = vmatpush1.msra.mxu0 0.0
        %2170 = vmatprep.subr.mxu0 0.0
        %2171 = vmatpush1.msra.mxu0 0.0
        %2172 = vmatprep.subr.mxu0 0.0
        %2173 = vmatpush1.msra.mxu0 0.0
        %2174 = vmatprep.subr.mxu0 0.0
        %2175 = vmatpush1.msra.mxu0 0.0
        %2176 = vmatprep.subr.mxu0 0.0
        %2177 = vmatpush1.msra.mxu0 0.0
        %2178 = vmatprep.subr.mxu0 0.0
        %2179 = vmatpush1.msra.mxu0 0.0
        %2180 = vmatprep.subr.mxu0 0.0
        %2181 = vmatpush1.msra.mxu0 0.0
        %2182 = vmatprep.subr.mxu0 0.0
        %2183 = vmatpush1.msra.mxu0 0.0
        %2184 = vmatprep.subr.mxu0 0.0
        %2185 = vmatpush1.msra.mxu0 0.0
        %2186 = vmatprep.subr.mxu0 0.0
        %2187 = vmatpush1.msra.mxu0 0.0
        %2188 = vmatprep.subr.mxu0 0.0
        %2189 = vmatpush1.msra.mxu0 0.0
        %2190 = vmatprep.subr.mxu0 0.0
        %2191 = vmatpush1.msra.mxu0 0.0
        %2192 = vmatprep.subr.mxu0 0.0
        %2193 = vmatpush1.msra.mxu0 0.0
        %2194 = vmatprep.subr.mxu0 0.0
        %2195 = vmatpush1.msra.mxu0 0.0
        %2196 = vmatprep.subr.mxu0 0.0
        %2197 = vmatpush1.msra.mxu0 0.0
        %2198 = vmatprep.subr.mxu0 0.0
        %2199 = vmatpush1.msra.mxu0 0.0
        %2200 = vmatprep.subr.mxu0 0.0
        %2201 = vmatpush1.msra.mxu0 0.0
        %2202 = vmatprep.subr.mxu0 0.0
        %2203 = vmatpush1.msra.mxu0 0.0
        %2204 = vmatprep.subr.mxu0 0.0
        %2205 = vmatpush1.msra.mxu0 0.0
        %2206 = vmatprep.subr.mxu0 0.0
        %2207 = vmatpush1.msra.mxu0 0.0
        %2208 = vmatprep.subr.mxu0 0.0
        %2209 = vmatpush1.msra.mxu0 0.0
        %2210 = vmatprep.subr.mxu0 0.0
        %2211 = vmatpush1.msra.mxu0 0.0
        %2212 = vmatprep.subr.mxu0 0.0
        %2213 = vmatpush1.msra.mxu0 0.0
        %2214 = vmatprep.subr.mxu0 0.0
        %2215 = vmatpush1.msra.mxu0 0.0
        %2216 = vmatprep.subr.mxu0 0.0
        %2217 = vmatpush1.msra.mxu0 0.0
        %2218 = vmatprep.subr.mxu0 0.0
        %2219 = vmatpush1.msra.mxu0 0.0
        %2220 = vmatprep.mubr.f32.mxu0 0.0
        %v2221 = vand.u32 %v2055, 4294901760
        %2222 = vmatmul.mubr.f32.gmra.mrb[0].mxu0 %v2221
        %v2223 = vpop.f32.mrb[0].mxu0
        %v2224 = vadd.f32 %v2133, %v2223
        %v2225 = vpop.f32.mrb[0].mxu0
        %2226 = vdwg.mxu0
        %2227 = vmatprep.subr.mxu0 0.0
        %v2228 = vand.u32 %v2043, 4294901760
        %v2229 = vsub.f32 %v2043, %v2228
        %2230 = vmatpush1.msra.mxu0 %v2229
        %2231 = vmatprep.subr.mxu0 0.0
        %v2232 = vand.u32 %v2044, 4294901760
        %v2233 = vsub.f32 %v2044, %v2232
        %2234 = vmatpush1.msra.mxu0 %v2233
        %2235 = vmatprep.subr.mxu0 0.0
        %v2236 = vand.u32 %v2045, 4294901760
        %v2237 = vsub.f32 %v2045, %v2236
        %2238 = vmatpush1.msra.mxu0 %v2237
        %2239 = vmatprep.subr.mxu0 0.0
        %v2240 = vand.u32 %v2046, 4294901760
        %v2241 = vsub.f32 %v2046, %v2240
        %2242 = vmatpush1.msra.mxu0 %v2241
        %2243 = vmatprep.subr.mxu0 0.0
        %2244 = vmatpush1.msra.mxu0 0.0
        %2245 = vmatprep.subr.mxu0 0.0
        %2246 = vmatpush1.msra.mxu0 0.0
        %2247 = vmatprep.subr.mxu0 0.0
        %2248 = vmatpush1.msra.mxu0 0.0
        %2249 = vmatprep.subr.mxu0 0.0
        %2250 = vmatpush1.msra.mxu0 0.0
        %2251 = vmatprep.subr.mxu0 0.0
        %2252 = vmatpush1.msra.mxu0 0.0
        %2253 = vmatprep.subr.mxu0 0.0
        %2254 = vmatpush1.msra.mxu0 0.0
        %2255 = vmatprep.subr.mxu0 0.0
        %2256 = vmatpush1.msra.mxu0 0.0
        %2257 = vmatprep.subr.mxu0 0.0
        %2258 = vmatpush1.msra.mxu0 0.0
        %2259 = vmatprep.subr.mxu0 0.0
        %2260 = vmatpush1.msra.mxu0 0.0
        %2261 = vmatprep.subr.mxu0 0.0
        %2262 = vmatpush1.msra.mxu0 0.0
        %2263 = vmatprep.subr.mxu0 0.0
        %2264 = vmatpush1.msra.mxu0 0.0
        %2265 = vmatprep.subr.mxu0 0.0
        %2266 = vmatpush1.msra.mxu0 0.0
        %2267 = vmatprep.subr.mxu0 0.0
        %2268 = vmatpush1.msra.mxu0 0.0
        %2269 = vmatprep.subr.mxu0 0.0
        %2270 = vmatpush1.msra.mxu0 0.0
        %2271 = vmatprep.subr.mxu0 0.0
        %2272 = vmatpush1.msra.mxu0 0.0
        %2273 = vmatprep.subr.mxu0 0.0
        %2274 = vmatpush1.msra.mxu0 0.0
        %2275 = vmatprep.subr.mxu0 0.0
        %2276 = vmatpush1.msra.mxu0 0.0
        %2277 = vmatprep.subr.mxu0 0.0
        %2278 = vmatpush1.msra.mxu0 0.0
        %2279 = vmatprep.subr.mxu0 0.0
        %2280 = vmatpush1.msra.mxu0 0.0
        %2281 = vmatprep.subr.mxu0 0.0
        %2282 = vmatpush1.msra.mxu0 0.0
        %2283 = vmatprep.subr.mxu0 0.0
        %2284 = vmatpush1.msra.mxu0 0.0
        %2285 = vmatprep.subr.mxu0 0.0
        %2286 = vmatpush1.msra.mxu0 0.0
        %2287 = vmatprep.subr.mxu0 0.0
        %2288 = vmatpush1.msra.mxu0 0.0
        %2289 = vmatprep.subr.mxu0 0.0
        %2290 = vmatpush1.msra.mxu0 0.0
        %2291 = vmatprep.subr.mxu0 0.0
        %2292 = vmatpush1.msra.mxu0 0.0
        %2293 = vmatprep.subr.mxu0 0.0
        %2294 = vmatpush1.msra.mxu0 0.0
        %2295 = vmatprep.subr.mxu0 0.0
        %2296 = vmatpush1.msra.mxu0 0.0
        %2297 = vmatprep.subr.mxu0 0.0
        %2298 = vmatpush1.msra.mxu0 0.0
        %2299 = vmatprep.mubr.f32.mxu0 0.0
        %v2300 = vand.u32 %v2055, 4294901760
        %v2301 = vsub.f32 %v2055, %v2300
        %2302 = vmatmul.mubr.f32.gmra.mrb[0].mxu0 %v2301
        %v2303 = vpop.f32.mrb[0].mxu0
        %v2304 = vadd.f32 %v2224, %v2303
        %v2305 = vpop.f32.mrb[0].mxu0
        %2306 = vdwg.mxu0
        %2307 = vmatprep.subr.mxu0 0.0
        %v2308 = vand.u32 %v2043, 4294901760
        %2309 = vmatpush1.msra.mxu0 %v2308
        %2310 = vmatprep.subr.mxu0 0.0
        %v2311 = vand.u32 %v2044, 4294901760
        %2312 = vmatpush1.msra.mxu0 %v2311
        %2313 = vmatprep.subr.mxu0 0.0
        %v2314 = vand.u32 %v2045, 4294901760
        %2315 = vmatpush1.msra.mxu0 %v2314
        %2316 = vmatprep.subr.mxu0 0.0
        %v2317 = vand.u32 %v2046, 4294901760
        %2318 = vmatpush1.msra.mxu0 %v2317
        %2319 = vmatprep.subr.mxu0 0.0
        %2320 = vmatpush1.msra.mxu0 0.0
        %2321 = vmatprep.subr.mxu0 0.0
        %2322 = vmatpush1.msra.mxu0 0.0
        %2323 = vmatprep.subr.mxu0 0.0
        %2324 = vmatpush1.msra.mxu0 0.0
        %2325 = vmatprep.subr.mxu0 0.0
        %2326 = vmatpush1.msra.mxu0 0.0
        %2327 = vmatprep.subr.mxu0 0.0
        %2328 = vmatpush1.msra.mxu0 0.0
        %2329 = vmatprep.subr.mxu0 0.0
        %2330 = vmatpush1.msra.mxu0 0.0
        %2331 = vmatprep.subr.mxu0 0.0
        %2332 = vmatpush1.msra.mxu0 0.0
        %2333 = vmatprep.subr.mxu0 0.0
        %2334 = vmatpush1.msra.mxu0 0.0
        %2335 = vmatprep.subr.mxu0 0.0
        %2336 = vmatpush1.msra.mxu0 0.0
        %2337 = vmatprep.subr.mxu0 0.0
        %2338 = vmatpush1.msra.mxu0 0.0
        %2339 = vmatprep.subr.mxu0 0.0
        %2340 = vmatpush1.msra.mxu0 0.0
        %2341 = vmatprep.subr.mxu0 0.0
        %2342 = vmatpush1.msra.mxu0 0.0
        %2343 = vmatprep.subr.mxu0 0.0
        %2344 = vmatpush1.msra.mxu0 0.0
        %2345 = vmatprep.subr.mxu0 0.0
        %2346 = vmatpush1.msra.mxu0 0.0
        %2347 = vmatprep.subr.mxu0 0.0
        %2348 = vmatpush1.msra.mxu0 0.0
        %2349 = vmatprep.subr.mxu0 0.0
        %2350 = vmatpush1.msra.mxu0 0.0
        %2351 = vmatprep.subr.mxu0 0.0
        %2352 = vmatpush1.msra.mxu0 0.0
        %2353 = vmatprep.subr.mxu0 0.0
        %2354 = vmatpush1.msra.mxu0 0.0
        %2355 = vmatprep.subr.mxu0 0.0
        %2356 = vmatpush1.msra.mxu0 0.0
        %2357 = vmatprep.subr.mxu0 0.0
        %2358 = vmatpush1.msra.mxu0 0.0
        %2359 = vmatprep.subr.mxu0 0.0
        %2360 = vmatpush1.msra.mxu0 0.0
        %2361 = vmatprep.subr.mxu0 0.0
        %2362 = vmatpush1.msra.mxu0 0.0
        %2363 = vmatprep.subr.mxu0 0.0
        %2364 = vmatpush1.msra.mxu0 0.0
        %2365 = vmatprep.subr.mxu0 0.0
        %2366 = vmatpush1.msra.mxu0 0.0
        %2367 = vmatprep.subr.mxu0 0.0
        %2368 = vmatpush1.msra.mxu0 0.0
        %2369 = vmatprep.subr.mxu0 0.0
        %2370 = vmatpush1.msra.mxu0 0.0
        %2371 = vmatprep.subr.mxu0 0.0
        %2372 = vmatpush1.msra.mxu0 0.0
        %2373 = vmatprep.subr.mxu0 0.0
        %2374 = vmatpush1.msra.mxu0 0.0
        %2375 = vmatprep.mubr.f32.mxu0 0.0
        %v2376 = vand.u32 %v2055, 4294901760
        %v2377 = vsub.f32 %v2055, %v2376
        %v2378 = vand.u32 %v2377, 4294901760
        %2379 = vmatmul.mubr.f32.gmra.mrb[0].mxu0 %v2378
        %v2380 = vpop.f32.mrb[0].mxu0
        %v2381 = vadd.f32 %v2304, %v2380
        %v2382 = vpop.f32.mrb[0].mxu0
        %2383 = vdwg.mxu0
        %2384 = vmatprep.subr.mxu0 0.0
        %v2385 = vand.u32 %v2043, 4294901760
        %v2386 = vsub.f32 %v2043, %v2385
        %v2387 = vand.u32 %v2386, 4294901760
        %2388 = vmatpush1.msra.mxu0 %v2387
        %2389 = vmatprep.subr.mxu0 0.0
        %v2390 = vand.u32 %v2044, 4294901760
        %v2391 = vsub.f32 %v2044, %v2390
        %v2392 = vand.u32 %v2391, 4294901760
        %2393 = vmatpush1.msra.mxu0 %v2392
        %2394 = vmatprep.subr.mxu0 0.0
        %v2395 = vand.u32 %v2045, 4294901760
        %v2396 = vsub.f32 %v2045, %v2395
        %v2397 = vand.u32 %v2396, 4294901760
        %2398 = vmatpush1.msra.mxu0 %v2397
        %2399 = vmatprep.subr.mxu0 0.0
        %v2400 = vand.u32 %v2046, 4294901760
        %v2401 = vsub.f32 %v2046, %v2400
        %v2402 = vand.u32 %v2401, 4294901760
        %2403 = vmatpush1.msra.mxu0 %v2402
        %2404 = vmatprep.subr.mxu0 0.0
        %2405 = vmatpush1.msra.mxu0 0.0
        %2406 = vmatprep.subr.mxu0 0.0
        %2407 = vmatpush1.msra.mxu0 0.0
        %2408 = vmatprep.subr.mxu0 0.0
        %2409 = vmatpush1.msra.mxu0 0.0
        %2410 = vmatprep.subr.mxu0 0.0
        %2411 = vmatpush1.msra.mxu0 0.0
        %2412 = vmatprep.subr.mxu0 0.0
        %2413 = vmatpush1.msra.mxu0 0.0
        %2414 = vmatprep.subr.mxu0 0.0
        %2415 = vmatpush1.msra.mxu0 0.0
        %2416 = vmatprep.subr.mxu0 0.0
        %2417 = vmatpush1.msra.mxu0 0.0
        %2418 = vmatprep.subr.mxu0 0.0
        %2419 = vmatpush1.msra.mxu0 0.0
        %2420 = vmatprep.subr.mxu0 0.0
        %2421 = vmatpush1.msra.mxu0 0.0
        %2422 = vmatprep.subr.mxu0 0.0
        %2423 = vmatpush1.msra.mxu0 0.0
        %2424 = vmatprep.subr.mxu0 0.0
        %2425 = vmatpush1.msra.mxu0 0.0
        %2426 = vmatprep.subr.mxu0 0.0
        %2427 = vmatpush1.msra.mxu0 0.0
        %2428 = vmatprep.subr.mxu0 0.0
        %2429 = vmatpush1.msra.mxu0 0.0
        %2430 = vmatprep.subr.mxu0 0.0
        %2431 = vmatpush1.msra.mxu0 0.0
        %2432 = vmatprep.subr.mxu0 0.0
        %2433 = vmatpush1.msra.mxu0 0.0
        %2434 = vmatprep.subr.mxu0 0.0
        %2435 = vmatpush1.msra.mxu0 0.0
        %2436 = vmatprep.subr.mxu0 0.0
        %2437 = vmatpush1.msra.mxu0 0.0
        %2438 = vmatprep.subr.mxu0 0.0
        %2439 = vmatpush1.msra.mxu0 0.0
        %2440 = vmatprep.subr.mxu0 0.0
        %2441 = vmatpush1.msra.mxu0 0.0
        %2442 = vmatprep.subr.mxu0 0.0
        %2443 = vmatpush1.msra.mxu0 0.0
        %2444 = vmatprep.subr.mxu0 0.0
        %2445 = vmatpush1.msra.mxu0 0.0
        %2446 = vmatprep.subr.mxu0 0.0
        %2447 = vmatpush1.msra.mxu0 0.0
        %2448 = vmatprep.subr.mxu0 0.0
        %2449 = vmatpush1.msra.mxu0 0.0
        %2450 = vmatprep.subr.mxu0 0.0
        %2451 = vmatpush1.msra.mxu0 0.0
        %2452 = vmatprep.subr.mxu0 0.0
        %2453 = vmatpush1.msra.mxu0 0.0
        %2454 = vmatprep.subr.mxu0 0.0
        %2455 = vmatpush1.msra.mxu0 0.0
        %2456 = vmatprep.subr.mxu0 0.0
        %2457 = vmatpush1.msra.mxu0 0.0
        %2458 = vmatprep.subr.mxu0 0.0
        %2459 = vmatpush1.msra.mxu0 0.0
        %2460 = vmatprep.mubr.f32.mxu0 0.0
        %v2461 = vand.u32 %v2055, 4294901760
        %2462 = vmatmul.mubr.f32.gmra.mrb[0].mxu0 %v2461
        %v2463 = vpop.f32.mrb[0].mxu0
        %v2464 = vadd.f32 %v2381, %v2463
        %v2465 = vpop.f32.mrb[0].mxu0
        %2466 = vdwg.mxu0
        %2467 = vmatprep.subr.mxu0 0.0
        %v2468 = vand.u32 %v2043, 4294901760
        %2469 = vmatpush1.msra.mxu0 %v2468
        %2470 = vmatprep.subr.mxu0 0.0
        %v2471 = vand.u32 %v2044, 4294901760
        %2472 = vmatpush1.msra.mxu0 %v2471
        %2473 = vmatprep.subr.mxu0 0.0
        %v2474 = vand.u32 %v2045, 4294901760
        %2475 = vmatpush1.msra.mxu0 %v2474
        %2476 = vmatprep.subr.mxu0 0.0
        %v2477 = vand.u32 %v2046, 4294901760
        %2478 = vmatpush1.msra.mxu0 %v2477
        %2479 = vmatprep.subr.mxu0 0.0
        %2480 = vmatpush1.msra.mxu0 0.0
        %2481 = vmatprep.subr.mxu0 0.0
        %2482 = vmatpush1.msra.mxu0 0.0
        %2483 = vmatprep.subr.mxu0 0.0
        %2484 = vmatpush1.msra.mxu0 0.0
        %2485 = vmatprep.subr.mxu0 0.0
        %2486 = vmatpush1.msra.mxu0 0.0
        %2487 = vmatprep.subr.mxu0 0.0
        %2488 = vmatpush1.msra.mxu0 0.0
        %2489 = vmatprep.subr.mxu0 0.0
        %2490 = vmatpush1.msra.mxu0 0.0
        %2491 = vmatprep.subr.mxu0 0.0
        %2492 = vmatpush1.msra.mxu0 0.0
        %2493 = vmatprep.subr.mxu0 0.0
        %2494 = vmatpush1.msra.mxu0 0.0
        %2495 = vmatprep.subr.mxu0 0.0
        %2496 = vmatpush1.msra.mxu0 0.0
        %2497 = vmatprep.subr.mxu0 0.0
        %2498 = vmatpush1.msra.mxu0 0.0
        %2499 = vmatprep.subr.mxu0 0.0
        %2500 = vmatpush1.msra.mxu0 0.0
        %2501 = vmatprep.subr.mxu0 0.0
        %2502 = vmatpush1.msra.mxu0 0.0
        %2503 = vmatprep.subr.mxu0 0.0
        %2504 = vmatpush1.msra.mxu0 0.0
        %2505 = vmatprep.subr.mxu0 0.0
        %2506 = vmatpush1.msra.mxu0 0.0
        %2507 = vmatprep.subr.mxu0 0.0
        %2508 = vmatpush1.msra.mxu0 0.0
        %2509 = vmatprep.subr.mxu0 0.0
        %2510 = vmatpush1.msra.mxu0 0.0
        %2511 = vmatprep.subr.mxu0 0.0
        %2512 = vmatpush1.msra.mxu0 0.0
        %2513 = vmatprep.subr.mxu0 0.0
        %2514 = vmatpush1.msra.mxu0 0.0
        %2515 = vmatprep.subr.mxu0 0.0
        %2516 = vmatpush1.msra.mxu0 0.0
        %2517 = vmatprep.subr.mxu0 0.0
        %2518 = vmatpush1.msra.mxu0 0.0
        %2519 = vmatprep.subr.mxu0 0.0
        %2520 = vmatpush1.msra.mxu0 0.0
        %2521 = vmatprep.subr.mxu0 0.0
        %2522 = vmatpush1.msra.mxu0 0.0
        %2523 = vmatprep.subr.mxu0 0.0
        %2524 = vmatpush1.msra.mxu0 0.0
        %2525 = vmatprep.subr.mxu0 0.0
        %2526 = vmatpush1.msra.mxu0 0.0
        %2527 = vmatprep.subr.mxu0 0.0
        %2528 = vmatpush1.msra.mxu0 0.0
        %2529 = vmatprep.subr.mxu0 0.0
        %2530 = vmatpush1.msra.mxu0 0.0
        %2531 = vmatprep.subr.mxu0 0.0
        %2532 = vmatpush1.msra.mxu0 0.0
        %2533 = vmatprep.subr.mxu0 0.0
        %2534 = vmatpush1.msra.mxu0 0.0
        %2535 = vmatprep.mubr.f32.mxu0 0.0
        %v2536 = vand.u32 %v2055, 4294901760
        %2537 = vmatmul.mubr.f32.gmra.mrb[0].mxu0 %v2536
        %v2538 = vpop.f32.mrb[0].mxu0
        %v2539 = vadd.f32 %v2464, %v2538
        %v2540 = vpop.f32.mrb[0].mxu0
        %2541 = vdwg.mxu0
        %vm2542 = vcmask 31744
        %2543 = vst.msk [vmem:[%s446] sm:$0xff] %vm2542, %v2539
        %p2544 = scmp.lt.s32.totalorder %s33, 1
        %s2545 = scalar_select %p2544, %s33, 1
        %s2546 = smul.addr %s2545, 8
        %s2547 = scalar_lea.vmem %s8, %s2546
        %s2548 = sand.u32 %s240, 1
        %s2549 = scalar_lea.sflag [#allocation3], %s2548
        %s2550 = sand.u32 %s240, 1
        %s2551 = smul.addr %s2550, 8
        %s2552 = scalar_lea.vmem [#allocation2], %s2551
        %s2553 = sand.u32 %s33, 1
        %s2554 = scalar_lea.sflag [#allocation5], %s2553
        %s2555 = sand.u32 %s266, 1
        %s2556 = smul.addr %s2555, 8
        %s2557 = scalar_lea.vmem [#allocation4], %s2556
        %s2558 = sand.u32 %s33, 1
        %s2559 = scalar_lea.sflag [#allocation5], %s2558
        %s2560 = sand.u32 %s292, 1
        %s2561 = smul.addr %s2560, 8
        %s2562 = scalar_lea.vmem [#allocation6], %s2561
        %s2563 = sand.u32 %s318, 1
        %s2564 = scalar_lea.sflag [#allocation8], %s2563
        %s2565 = sand.u32 %s318, 1
        %s2566 = smul.addr %s2565, 64
        %s2567 = scalar_lea.vmem [#allocation7], %s2566
        // Predicated region
        $region53: #{tpu_custom_call.1} parent=51 // pred_check
          %p2568 = pneg %p224
        $region54: #{tpu_custom_call.1} parent=51 // pred_check_branch
          %2570 = sbr.rel (%p2568) target = $region56
        $region55: #{tpu_custom_call.1} parent=51 // pred_region
          _
        $region56: #{tpu_custom_call.1} parent=51 // pred_fallthru
          _
        // Predicated region
        $region57: #{tpu_custom_call.1} parent=51 // pred_check
          %p2571 = pneg %p250
        $region58: #{tpu_custom_call.1} parent=51 // pred_check_branch
          %2573 = sbr.rel (%p2571) target = $region60
        $region59: #{tpu_custom_call.1} parent=51 // pred_region
          %s2575 = ssub.s32 128, 128
          %2576 = vsyncadd %s2549, %s2575
          %s2577 = smul.addr %s33, 128
          %s2578 = scalar_lea.hbm %s9, %s2577
          %s2580 = sshll.u32 %s2552, 4
          %s2581 = int_to_ptr.vmem [resolvable:$true] %s2580
          %2583 = dma.vmem_to_hbm [thread:$0]  %s2581, 128, %s2578, %s2549
        $region60: #{tpu_custom_call.1} parent=51 // pred_fallthru
          _
        // Predicated region
        $region61: #{tpu_custom_call.1} parent=51 // pred_check
          %p2584 = pneg %p276
        $region62: #{tpu_custom_call.1} parent=51 // pred_check_branch
          %2586 = sbr.rel (%p2584) target = $region64
        $region63: #{tpu_custom_call.1} parent=51 // pred_region
          %s2588 = ssub.s32 128, 128
          %2589 = vsyncadd %s2554, %s2588
          %s2590 = smul.addr %s33, 128
          %s2591 = scalar_lea.hbm %s10, %s2590
          %s2593 = sshll.u32 %s2557, 4
          %s2594 = int_to_ptr.vmem [resolvable:$true] %s2593
          %2596 = dma.vmem_to_hbm [thread:$0]  %s2594, 128, %s2591, %s2554
        $region64: #{tpu_custom_call.1} parent=51 // pred_fallthru
          _
        // Predicated region
        $region65: #{tpu_custom_call.1} parent=51 // pred_check
          %p2597 = pneg %p302
        $region66: #{tpu_custom_call.1} parent=51 // pred_check_branch
          %2599 = sbr.rel (%p2597) target = $region68
        $region67: #{tpu_custom_call.1} parent=51 // pred_region
          %s2601 = ssub.s32 128, 128
          %2602 = vsyncadd %s2559, %s2601
          %s2603 = smul.addr %s33, 128
          %s2604 = scalar_lea.hbm %s11, %s2603
          %s2606 = sshll.u32 %s2562, 4
          %s2607 = int_to_ptr.vmem [resolvable:$true] %s2606
          %2609 = dma.vmem_to_hbm [thread:$0]  %s2607, 128, %s2604, %s2559
        $region68: #{tpu_custom_call.1} parent=51 // pred_fallthru
          _
        // Predicated region
        $region69: #{tpu_custom_call.1} parent=51 // pred_check
          %p2610 = pneg %p328
        $region70: #{tpu_custom_call.1} parent=51 // pred_check_branch
          %2612 = sbr.rel (%p2610) target = $region72
        $region71: #{tpu_custom_call.1} parent=51 // pred_region
          %s2613 = smul.u32 8, %s33
          %s2615 = ssub.s32 1024, 1024
          %2616 = vsyncadd %s2564, %s2615
          %s2617 = smul.addr %s2613, 128
          %s2618 = scalar_lea.hbm %s12, %s2617
          %s2619 = sshll.u32 %s2567, 4
          %s2620 = int_to_ptr.vmem [resolvable:$true] %s2619
          %2625 = dma.vmem_to_hbm [thread:$0]  %s2620, 1024, %s2618, %s2564, 128, 128, 8
        $region72: #{tpu_custom_call.1} parent=51 // pred_fallthru
          _
      $region52: #{tpu_custom_call.1} parent=5 // pred_fallthru
        _
      %p2626 = scmp.le.s32.totalorder 2, %s28
      // Predicated region
      $region73: #{tpu_custom_call.1} parent=5 // pred_check
        %p2627 = pneg %p2626
      $region74: #{tpu_custom_call.1} parent=5 // pred_check_branch
        %2629 = sbr.rel (%p2627) target = $region76
      $region75: #{tpu_custom_call.1} parent=5 // pred_region
        %s2630 = ssub.s32 %s28, 2
        // Predicated region
        $region77: #{tpu_custom_call.1} parent=75 // pred_check
          %p2631 = pneg %p230
        $region78: #{tpu_custom_call.1} parent=75 // pred_check_branch
          %2633 = sbr.rel (%p2631) target = $region80
        $region79: #{tpu_custom_call.1} parent=75 // pred_region
          %p2634 = scmp.lt.s32.totalorder %s34, 1
          %s2635 = scalar_select %p2634, %s34, 1
          %s2636 = smul.addr %s2635, 8
          %s2637 = scalar_lea.vmem %s8, %s2636
        $region80: #{tpu_custom_call.1} parent=75 // pred_fallthru
          _
        // Predicated region
        $region81: #{tpu_custom_call.1} parent=75 // pred_check
          %p2638 = pneg %p256
        $region82: #{tpu_custom_call.1} parent=75 // pred_check_branch
          %2640 = sbr.rel (%p2638) target = $region84
        $region83: #{tpu_custom_call.1} parent=75 // pred_region
          %s2641 = sand.u32 %s241, 1
          %s2642 = scalar_lea.sflag [#allocation3], %s2641
          %s2643 = sand.u32 %s241, 1
          %s2644 = smul.addr %s2643, 8
          %s2645 = scalar_lea.vmem [#allocation2], %s2644
          %2646 = dma.done %s2642, 128
        $region84: #{tpu_custom_call.1} parent=75 // pred_fallthru
          _
        // Predicated region
        $region85: #{tpu_custom_call.1} parent=75 // pred_check
          %p2647 = pneg %p282
        $region86: #{tpu_custom_call.1} parent=75 // pred_check_branch
          %2649 = sbr.rel (%p2647) target = $region88
        $region87: #{tpu_custom_call.1} parent=75 // pred_region
          %s2650 = sand.u32 %s34, 1
          %s2651 = scalar_lea.sflag [#allocation5], %s2650
          %s2652 = sand.u32 %s267, 1
          %s2653 = smul.addr %s2652, 8
          %s2654 = scalar_lea.vmem [#allocation4], %s2653
          %2655 = dma.done %s2651, 128
        $region88: #{tpu_custom_call.1} parent=75 // pred_fallthru
          _
        // Predicated region
        $region89: #{tpu_custom_call.1} parent=75 // pred_check
          %p2656 = pneg %p308
        $region90: #{tpu_custom_call.1} parent=75 // pred_check_branch
          %2658 = sbr.rel (%p2656) target = $region92
        $region91: #{tpu_custom_call.1} parent=75 // pred_region
          %s2659 = sand.u32 %s34, 1
          %s2660 = scalar_lea.sflag [#allocation5], %s2659
          %s2661 = sand.u32 %s293, 1
          %s2662 = smul.addr %s2661, 8
          %s2663 = scalar_lea.vmem [#allocation6], %s2662
          %2664 = dma.done %s2660, 128
        $region92: #{tpu_custom_call.1} parent=75 // pred_fallthru
          _
        // Predicated region
        $region93: #{tpu_custom_call.1} parent=75 // pred_check
          %p2665 = pneg %p334
        $region94: #{tpu_custom_call.1} parent=75 // pred_check_branch
          %2667 = sbr.rel (%p2665) target = $region96
        $region95: #{tpu_custom_call.1} parent=75 // pred_region
          %s2668 = sand.u32 %s319, 1
          %s2669 = scalar_lea.sflag [#allocation8], %s2668
          %s2670 = sand.u32 %s319, 1
          %s2671 = smul.addr %s2670, 64
          %s2672 = scalar_lea.vmem [#allocation7], %s2671
          %2673 = dma.done %s2669, 1024
        $region96: #{tpu_custom_call.1} parent=75 // pred_fallthru
          _
      $region76: #{tpu_custom_call.1} parent=5 // pred_fallthru
        _
    $region6: #{tpu_custom_call.1} parent=1 // loop_footer
      %s32 = sadd.s32 1, %s28
    $region7: #{tpu_custom_call.1} parent=1 // loop_footer_branch
      %27 = sbr.rel target = $region3
    $region8: #{tpu_custom_call.1} parent=1 // loop_exit
      _
    %2674 = vsyncpa [#allocation3], 1
    %s2675 = scalar_lea.sflag [#allocation3], 1
    %2676 = vsyncpa %s2675, 1
    %2677 = vsyncpa [#allocation5], 1
    %s2678 = scalar_lea.sflag [#allocation5], 1
    %2679 = vsyncpa %s2678, 1
    %2680 = vsyncpa [#allocation8], 1
    %s2681 = scalar_lea.sflag [#allocation8], 1
    %2682 = vsyncpa %s2681, 1

</llo_original>
